<compile_context>
chip_gen: v6e
topology: v6e:2x2x1
jax: 0.10.0
libtpu: 0.0.40
codegen_flags: <defaults>
</compile_context>

<pallas_src>
import math
import numpy as np
import jax
import jax.numpy as jnp
from jax.experimental import pallas as pl
from jax.experimental.pallas import tpu as pltpu


def _round_up(x, m):
    return ((x + m - 1) // m) * m


def _cdiv(a, b):
    return -(-a // b)


def complex_conv2d_decoder(x, wr, br, wi, bi, *, stride, padding,
                           output_padding, dilation, groups=1,
                           target_rows=None):
    """Pallas implementation of ComplexConv2d_Decoder.forward.

    x       : (N, Cin, H, W, 2) float32, last dim = (real, imag)
    wr, wi  : (Cin, Cout, KH, KW)  ConvTranspose2d weights (PyTorch layout)
    br, bi  : (Cout,)              biases
    returns : (N, Cout, Ho, min(W, Wo), 2)
    """
    assert groups == 1  # TODO(synk): grouped transposed conv not implemented
    N, Cin, H, W, two = x.shape
    assert two == 2
    Cin_w, Cout, KH, KW = wr.shape
    assert Cin_w == Cin
    sh, sw = stride
    ph, pw = padding
    oph, opw = output_padding
    dh, dw = dilation

    # conv_transpose == stride-1 correlation of a zero-stuffed, padded input
    # with the spatially flipped kernel.
    pl_h = dh * (KH - 1) - ph
    pr_h = dh * (KH - 1) - ph + oph
    pl_w = dw * (KW - 1) - pw
    pr_w = dw * (KW - 1) - pw + opw
    assert min(pl_h, pr_h, pl_w, pr_w) >= 0, "unsupported padding configuration"

    Ho = (H - 1) * sh - 2 * ph + dh * (KH - 1) + oph + 1
    Wo = (W - 1) * sw - 2 * pw + dw * (KW - 1) + opw + 1
    Wc = min(W, Wo)                         # module crops width to input width

    Hs = (H - 1) * sh + 1                   # zero-stuffed extents
    Ws = (W - 1) * sw + 1
    Wp = pl_w + Ws + pr_w                   # padded width == Wo + (KW-1)*dw

    T = KH * KW
    Cpk = 2 * Cin                           # packed channels: ci*2 + (re/im)
    C2 = _round_up(max(2 * Cout, 1), 128)   # packed [real | imag] output lanes

    # ---------------- tiling over output rows (oh) ----------------
    try:
        phys_vmem = int(pltpu.get_tpu_info().vmem_capacity_bytes)
    except Exception:
        phys_vmem = 64 * 1024 * 1024
    if target_rows is None:
        target_rows = 2048 if phys_vmem > (64 << 20) else 1024

    align = 8 // math.gcd(Wp, 8)            # TH multiple s.t. TH*Wp % 8 == 0
    th_cap = max(align, ((target_rows // Wp) // align) * align)
    n_t = max(1, _cdiv(Ho, th_cap))
    if (N * n_t) % 2 == 1:                  # v7x: even total parallel work
        n_t += 1
    TH = _round_up(_cdiv(Ho, n_t), align)
    Ho_pad = n_t * TH
    rows = TH * Wp                          # matmul M-rows per grid step

    # Padded input rows large enough for every tap slice (flat, per batch).
    Hp_pad = Ho_pad + (KH - 1) * dh + 1
    bot_pad = Hp_pad - pl_h - Hs
    assert bot_pad >= pr_h >= 0

    # ---------------- glue (XLA): stuff / pad / flatten ----------------
    # channel packing: channel = ci*2 + (0 real, 1 imag)
    xc = jnp.transpose(x, (0, 2, 3, 1, 4)).reshape(N, H, W, Cpk)
    xs = jnp.zeros((N, Hs, Ws, Cpk), x.dtype).at[:, ::sh, ::sw, :].set(xc)
    xp = jnp.pad(xs, ((0, 0), (pl_h, bot_pad), (pl_w, pr_w), (0, 0)))
    x_flat = xp.reshape(N, Hp_pad * Wp, Cpk).astype(jnp.float32)

    # per-tap packed weights: rows = ci*2 + (re/im), cols = [real | imag]
    wfr = wr[:, :, ::-1, ::-1]                                   # spatial flip
    wfi = wi[:, :, ::-1, ::-1]
    wr_t = jnp.transpose(wfr, (2, 3, 0, 1)).reshape(T, Cin, Cout)
    wi_t = jnp.transpose(wfi, (2, 3, 0, 1)).reshape(T, Cin, Cout)
    w_top = jnp.concatenate([wr_t, wi_t], axis=-1)               # fed by xr
    w_bot = jnp.concatenate([-wi_t, wr_t], axis=-1)              # fed by xi
    w_pk = jnp.stack([w_top, w_bot], axis=2).reshape(T, Cpk, 2 * Cout)
    w_pk = jnp.pad(w_pk, ((0, 0), (0, 0), (0, C2 - 2 * Cout))).astype(jnp.float32)

    b_pk = jnp.concatenate([br - bi, br + bi])                   # [real | imag] bias
    b_pk = jnp.pad(b_pk, (0, C2 - 2 * Cout)).reshape(1, C2).astype(jnp.float32)

    # ---------------- Pallas kernel ----------------
    def _kernel(x_ref, w_ref, b_ref, o_ref):
        # o_ref rows enumerate (oh, ow') flattened with stride Wp; the tap
        # (kh, kw) column of the im2col matrix is the same flat rows shifted
        # by kh*dh*Wp + kw*dw -> a single dynamic sublane slice per tap.
        base = pl.multiple_of(pl.program_id(1) * rows, 8)
        acc = None
        for j in range(T):
            kh, kw = divmod(j, KW)
            off = kh * dh * Wp + kw * dw
            win = x_ref[pl.ds(base + off, rows), :]              # (rows, Cpk)
            p = jnp.dot(win, w_ref[j], preferred_element_type=jnp.float32)
            acc = p if acc is None else acc + p
        o_ref[...] = (acc + b_ref[...]).astype(o_ref.dtype)

    in_specs = [
        # full padded image per batch element, resident across the oh-tile axis
        pl.BlockSpec((None, Hp_pad * Wp, Cpk), lambda n, t: (n, 0, 0)),
        # resident packed weights / bias: constant index_map, single-buffered
        pl.BlockSpec((T, Cpk, C2), lambda n, t: (0, 0, 0),
                     pipeline_mode=pl.Buffered(1)),
        pl.BlockSpec((1, C2), lambda n, t: (0, 0),
                     pipeline_mode=pl.Buffered(1)),
    ]
    out_spec = pl.BlockSpec((None, rows, C2), lambda n, t: (n, t, 0))

    def _tiled_bytes(r, c):                 # f32 VMEM footprint incl. (8,128) tiling
        return 4 * _round_up(r, 8) * _round_up(c, 128)

    vmem_est = (2 * _tiled_bytes(Hp_pad * Wp, Cpk)       # input, double buffered
                + 2 * _tiled_bytes(rows, C2)             # output, double buffered
                + T * _tiled_bytes(Cpk, C2)              # resident weights
                + _tiled_bytes(1, C2))                   # resident bias
    vmem_cap = (phys_vmem * 3) // 4                      # 48 MiB v7x / 96 MiB v5e,v6e
    vmem_limit = int(min(max(2 * vmem_est, 32 << 20), vmem_cap))

    out = pl.pallas_call(
        _kernel,
        grid=(N, n_t),
        in_specs=in_specs,
        out_specs=out_spec,
        out_shape=jax.ShapeDtypeStruct((N, Ho_pad * Wp, C2), jnp.float32),
        compiler_params=pltpu.CompilerParams(
            dimension_semantics=("parallel", "parallel"),
            vmem_limit_bytes=vmem_limit),
    )(x_flat, w_pk, b_pk)

    # ---------------- crop + unpack (XLA) ----------------
    out = out.reshape(N, Ho_pad, Wp, C2)[:, :Ho, :Wc, :]
    out_r = out[..., :Cout]
    out_i = out[..., Cout:2 * Cout]
    res = jnp.stack([out_r, out_i], axis=-1)             # (N, Ho, Wc, Cout, 2)
    return jnp.transpose(res, (0, 3, 1, 2, 4))           # (N, Cout, Ho, Wc, 2)


# ---------------- reference (NumPy, direct conv_transpose definition) ----------------
def _conv_transpose2d_np(x, w, b, stride, padding, output_padding, dilation):
    N, Cin, H, W = x.shape
    _, Cout, KH, KW = w.shape
    sh, sw = stride
    ph, pw = padding
    oph, opw = output_padding
    dh, dw = dilation
    Ho = (H - 1) * sh - 2 * ph + dh * (KH - 1) + oph + 1
    Wo = (W - 1) * sw - 2 * pw + dw * (KW - 1) + opw + 1
    y = np.zeros((N, Cout, Ho, Wo), np.float32)
    for n in range(N):
        for ci in range(Cin):
            for i in range(H):
                for j in range(W):
                    v = x[n, ci, i, j]
                    for kh in range(KH):
                        for kw in range(KW):
                            oi = i * sh - ph + kh * dh
                            oj = j * sw - pw + kw * dw
                            if 0 <= oi < Ho and 0 <= oj < Wo:
                                y[n, :, oi, oj] += v * w[ci, :, kh, kw]
    return y + b[None, :, None, None]


def _reference_numpy(x, wr, br, wi, bi, stride, padding, output_padding, dilation):
    xr, xi = x[..., 0], x[..., 1]
    rr = _conv_transpose2d_np(xr, wr, br, stride, padding, output_padding, dilation)
    ii = _conv_transpose2d_np(xi, wi, bi, stride, padding, output_padding, dilation)
    ri = _conv_transpose2d_np(xi, wr, br, stride, padding, output_padding, dilation)
    ir = _conv_transpose2d_np(xr, wi, bi, stride, padding, output_padding, dilation)
    W = x.shape[3]
    out_r = (rr - ii)[..., :W]
    out_i = (ri + ir)[..., :W]
    return np.stack([out_r, out_i], axis=-1)


if __name__ == "__main__":
    key = jax.random.PRNGKey(0)
    N, Cin, Cout, H, W = 2, 4, 3, 8, 16
    KH, KW = 3, 2
    stride = (2, 1)
    padding = (1, 0)
    output_padding = (1, 0)
    dilation = (1, 1)

    ks = jax.random.split(key, 5)
    x = jax.random.normal(ks[0], (N, Cin, H, W, 2), jnp.float32)
    bound = 1.0 / float(np.sqrt(Cin * KH * KW))
    wr = jax.random.uniform(ks[1], (Cin, Cout, KH, KW), jnp.float32, -bound, bound)
    wi = jax.random.uniform(ks[2], (Cin, Cout, KH, KW), jnp.float32, -bound, bound)
    br = jax.random.uniform(ks[3], (Cout,), jnp.float32, -bound, bound)
    bi = jax.random.uniform(ks[4], (Cout,), jnp.float32, -bound, bound)

    out = complex_conv2d_decoder(x, wr, br, wi, bi, stride=stride,
                                 padding=padding, output_padding=output_padding,
                                 dilation=dilation)
    out = jax.block_until_ready(out)

    ref = _reference_numpy(np.asarray(x), np.asarray(wr), np.asarray(br),
                           np.asarray(wi), np.asarray(bi),
                           stride, padding, output_padding, dilation)
    assert out.shape == ref.shape, (out.shape, ref.shape)
    assert np.allclose(np.asarray(out), ref, atol=1e-4, rtol=1e-4), \
        float(np.max(np.abs(np.asarray(out) - ref)))
    print("KERNEL_OK")
</pallas_src>

<mosaic_0001>
module attributes {stable_mosaic.version = 11 : i64} {
  func.func @_kernel(%arg0: i32, %arg1: i32, %arg2: memref<1x342x8xf32, #tpu.memory_space<vmem>>, %arg3: memref<6x8x128xf32, #tpu.memory_space<vmem>>, %arg4: memref<1x128xf32, #tpu.memory_space<vmem>>, %arg5: memref<1x288x128xf32, #tpu.memory_space<vmem>>) attributes {dimension_semantics = [#tpu.dimension_semantics<parallel>, #tpu.dimension_semantics<parallel>], iteration_bounds = array<i64: 2, 1>, scalar_prefetch = 0 : i64, scratch_operands = 0 : i64, tpu.core_type = #tpu.core_type<tc>, window_params = [{transform_indices = @transform_0, window_bounds = array<i64: 1, 342, 8>}, {pipeline_mode = #tpu.pipeline_mode<synchronous>, transform_indices = @transform_1, window_bounds = array<i64: 6, 8, 128>}, {pipeline_mode = #tpu.pipeline_mode<synchronous>, transform_indices = @transform_2, window_bounds = array<i64: 1, 128>}, {transform_indices = @transform_3, window_bounds = array<i64: 1, 288, 128>}]} {
    %c288_i32 = arith.constant 288 : i32
    %0 = arith.muli %arg1, %c288_i32 : i32
    %1 = tpu.assume_multiple %0, 8 : i32
    %c0_i32 = arith.constant 0 : i32
    %2 = arith.addi %1, %c0_i32 : i32
    %c0 = arith.constant 0 : index
    %3 = arith.index_cast %2 : i32 to index
    %c0_0 = arith.constant 0 : index
    %4 = vector.load %arg2[%c0, %3, %c0_0] : memref<1x342x8xf32, #tpu.memory_space<vmem>>, vector<1x288x8xf32>
    %5 = vector.shape_cast %4 : vector<1x288x8xf32> to vector<288x8xf32>
    %c0_1 = arith.constant 0 : index
    %c0_2 = arith.constant 0 : index
    %c0_3 = arith.constant 0 : index
    %6 = vector.load %arg3[%c0_1, %c0_2, %c0_3] : memref<6x8x128xf32, #tpu.memory_space<vmem>>, vector<1x8x128xf32>
    %7 = vector.shape_cast %6 : vector<1x8x128xf32> to vector<8x128xf32>
    %cst = arith.constant dense<0.000000e+00> : vector<288x128xf32>
    %8 = tpu.matmul %5, %7, %cst {dimension_numbers = #tpu.dot_dimension_numbers<[1], [0], [0], [1], [0, 0, 1, 1], [], []>} : vector<288x8xf32>, vector<8x128xf32>, vector<288x128xf32> -> vector<288x128xf32>
    %c1_i32 = arith.constant 1 : i32
    %9 = arith.addi %1, %c1_i32 : i32
    %c0_4 = arith.constant 0 : index
    %10 = arith.index_cast %9 : i32 to index
    %c0_5 = arith.constant 0 : index
    %11 = vector.load %arg2[%c0_4, %10, %c0_5] : memref<1x342x8xf32, #tpu.memory_space<vmem>>, vector<1x288x8xf32>
    %12 = vector.shape_cast %11 : vector<1x288x8xf32> to vector<288x8xf32>
    %c1 = arith.constant 1 : index
    %c0_6 = arith.constant 0 : index
    %c0_7 = arith.constant 0 : index
    %13 = vector.load %arg3[%c1, %c0_6, %c0_7] : memref<6x8x128xf32, #tpu.memory_space<vmem>>, vector<1x8x128xf32>
    %14 = vector.shape_cast %13 : vector<1x8x128xf32> to vector<8x128xf32>
    %cst_8 = arith.constant dense<0.000000e+00> : vector<288x128xf32>
    %15 = tpu.matmul %12, %14, %cst_8 {dimension_numbers = #tpu.dot_dimension_numbers<[1], [0], [0], [1], [0, 0, 1, 1], [], []>} : vector<288x8xf32>, vector<8x128xf32>, vector<288x128xf32> -> vector<288x128xf32>
    %16 = arith.addf %8, %15 : vector<288x128xf32>
    %c18_i32 = arith.constant 18 : i32
    %17 = arith.addi %1, %c18_i32 : i32
    %c0_9 = arith.constant 0 : index
    %18 = arith.index_cast %17 : i32 to index
    %c0_10 = arith.constant 0 : index
    %19 = vector.load %arg2[%c0_9, %18, %c0_10] : memref<1x342x8xf32, #tpu.memory_space<vmem>>, vector<1x288x8xf32>
    %20 = vector.shape_cast %19 : vector<1x288x8xf32> to vector<288x8xf32>
    %c2 = arith.constant 2 : index
    %c0_11 = arith.constant 0 : index
    %c0_12 = arith.constant 0 : index
    %21 = vector.load %arg3[%c2, %c0_11, %c0_12] : memref<6x8x128xf32, #tpu.memory_space<vmem>>, vector<1x8x128xf32>
    %22 = vector.shape_cast %21 : vector<1x8x128xf32> to vector<8x128xf32>
    %cst_13 = arith.constant dense<0.000000e+00> : vector<288x128xf32>
    %23 = tpu.matmul %20, %22, %cst_13 {dimension_numbers = #tpu.dot_dimension_numbers<[1], [0], [0], [1], [0, 0, 1, 1], [], []>} : vector<288x8xf32>, vector<8x128xf32>, vector<288x128xf32> -> vector<288x128xf32>
    %24 = arith.addf %16, %23 : vector<288x128xf32>
    %c19_i32 = arith.constant 19 : i32
    %25 = arith.addi %1, %c19_i32 : i32
    %c0_14 = arith.constant 0 : index
    %26 = arith.index_cast %25 : i32 to index
    %c0_15 = arith.constant 0 : index
    %27 = vector.load %arg2[%c0_14, %26, %c0_15] : memref<1x342x8xf32, #tpu.memory_space<vmem>>, vector<1x288x8xf32>
    %28 = vector.shape_cast %27 : vector<1x288x8xf32> to vector<288x8xf32>
    %c3 = arith.constant 3 : index
    %c0_16 = arith.constant 0 : index
    %c0_17 = arith.constant 0 : index
    %29 = vector.load %arg3[%c3, %c0_16, %c0_17] : memref<6x8x128xf32, #tpu.memory_space<vmem>>, vector<1x8x128xf32>
    %30 = vector.shape_cast %29 : vector<1x8x128xf32> to vector<8x128xf32>
    %cst_18 = arith.constant dense<0.000000e+00> : vector<288x128xf32>
    %31 = tpu.matmul %28, %30, %cst_18 {dimension_numbers = #tpu.dot_dimension_numbers<[1], [0], [0], [1], [0, 0, 1, 1], [], []>} : vector<288x8xf32>, vector<8x128xf32>, vector<288x128xf32> -> vector<288x128xf32>
    %32 = arith.addf %24, %31 : vector<288x128xf32>
    %c36_i32 = arith.constant 36 : i32
    %33 = arith.addi %1, %c36_i32 : i32
    %c0_19 = arith.constant 0 : index
    %34 = arith.index_cast %33 : i32 to index
    %c0_20 = arith.constant 0 : index
    %35 = vector.load %arg2[%c0_19, %34, %c0_20] : memref<1x342x8xf32, #tpu.memory_space<vmem>>, vector<1x288x8xf32>
    %36 = vector.shape_cast %35 : vector<1x288x8xf32> to vector<288x8xf32>
    %c4 = arith.constant 4 : index
    %c0_21 = arith.constant 0 : index
    %c0_22 = arith.constant 0 : index
    %37 = vector.load %arg3[%c4, %c0_21, %c0_22] : memref<6x8x128xf32, #tpu.memory_space<vmem>>, vector<1x8x128xf32>
    %38 = vector.shape_cast %37 : vector<1x8x128xf32> to vector<8x128xf32>
    %cst_23 = arith.constant dense<0.000000e+00> : vector<288x128xf32>
    %39 = tpu.matmul %36, %38, %cst_23 {dimension_numbers = #tpu.dot_dimension_numbers<[1], [0], [0], [1], [0, 0, 1, 1], [], []>} : vector<288x8xf32>, vector<8x128xf32>, vector<288x128xf32> -> vector<288x128xf32>
    %40 = arith.addf %32, %39 : vector<288x128xf32>
    %c37_i32 = arith.constant 37 : i32
    %41 = arith.addi %1, %c37_i32 : i32
    %c0_24 = arith.constant 0 : index
    %42 = arith.index_cast %41 : i32 to index
    %c0_25 = arith.constant 0 : index
    %43 = vector.load %arg2[%c0_24, %42, %c0_25] : memref<1x342x8xf32, #tpu.memory_space<vmem>>, vector<1x288x8xf32>
    %44 = vector.shape_cast %43 : vector<1x288x8xf32> to vector<288x8xf32>
    %c5 = arith.constant 5 : index
    %c0_26 = arith.constant 0 : index
    %c0_27 = arith.constant 0 : index
    %45 = vector.load %arg3[%c5, %c0_26, %c0_27] : memref<6x8x128xf32, #tpu.memory_space<vmem>>, vector<1x8x128xf32>
    %46 = vector.shape_cast %45 : vector<1x8x128xf32> to vector<8x128xf32>
    %cst_28 = arith.constant dense<0.000000e+00> : vector<288x128xf32>
    %47 = tpu.matmul %44, %46, %cst_28 {dimension_numbers = #tpu.dot_dimension_numbers<[1], [0], [0], [1], [0, 0, 1, 1], [], []>} : vector<288x8xf32>, vector<8x128xf32>, vector<288x128xf32> -> vector<288x128xf32>
    %48 = arith.addf %40, %47 : vector<288x128xf32>
    %c0_29 = arith.constant 0 : index
    %c0_30 = arith.constant 0 : index
    %49 = vector.load %arg4[%c0_29, %c0_30] : memref<1x128xf32, #tpu.memory_space<vmem>>, vector<1x128xf32>
    %50 = vector.broadcast %49 : vector<1x128xf32> to vector<288x128xf32>
    %51 = arith.addf %48, %50 : vector<288x128xf32>
    %c0_31 = arith.constant 0 : index
    %c0_32 = arith.constant 0 : index
    %c0_33 = arith.constant 0 : index
    %52 = vector.load %arg5[%c0_31, %c0_32, %c0_33] : memref<1x288x128xf32, #tpu.memory_space<vmem>>, vector<1x288x128xf32>
    %53 = vector.shape_cast %52 : vector<1x288x128xf32> to vector<288x128xf32>
    %54 = vector.shape_cast %51 : vector<288x128xf32> to vector<1x288x128xf32>
    tpu.vector_store %arg5[%c0_31, %c0_32, %c0_33], %54 {strides = array<i32>} : memref<1x288x128xf32, #tpu.memory_space<vmem>>, vector<1x288x128xf32>,
    return
  }
  func.func @transform_0(%arg0: i32, %arg1: i32) -> (i32, i32, i32) {
    %c0_i32 = arith.constant 0 : i32
    %c0_i32_0 = arith.constant 0 : i32
    %c0_i32_1 = arith.constant 0 : i32
    return %arg0, %c0_i32, %c0_i32_0 : i32, i32, i32
  }
  func.func @transform_1(%arg0: i32, %arg1: i32) -> (i32, i32, i32) {
    %c0_i32 = arith.constant 0 : i32
    %c0_i32_0 = arith.constant 0 : i32
    %c0_i32_1 = arith.constant 0 : i32
    %c0_i32_2 = arith.constant 0 : i32
    return %c0_i32, %c0_i32_0, %c0_i32_1 : i32, i32, i32
  }
  func.func @transform_2(%arg0: i32, %arg1: i32) -> (i32, i32) {
    %c0_i32 = arith.constant 0 : i32
    %c0_i32_0 = arith.constant 0 : i32
    %c0_i32_1 = arith.constant 0 : i32
    return %c0_i32, %c0_i32_0 : i32, i32
  }
  func.func @transform_3(%arg0: i32, %arg1: i32) -> (i32, i32, i32) {
    %c0_i32 = arith.constant 0 : i32
    %c0_i32_0 = arith.constant 0 : i32
    return %arg0, %arg1, %c0_i32 : i32, i32, i32
  }
}

</mosaic_0001>

<llo_original>
// kernel: tpu_custom_call.1
$region0: #{tpu_custom_call.1}
  #allocation0 [shape = 'u32[]', space=smem, size = 0x4, offset = 0x4, fixed_abs, tag = 'smem constant byte address 0x4 - core index']
  #allocation1 [shape = 'u32[144,128]{1,0:T(1,128)}', space=vmem, size = 0x12000, scoped, tag = 'internal scratch']
  %s0 = inlined_call_operand.vmem [shape: f32[2,342,8], index: 0, kind: input, shape index: {}]
  %s1 = inlined_call_operand.vmem [shape: f32[6,8,128], index: 1, kind: input, shape index: {}]
  %s2 = inlined_call_operand.vmem [shape: f32[1,128], index: 2, kind: input, shape index: {}]
  %s3 = inlined_call_operand.hbm [shape: f32[2,288,128], index: 3, kind: output, shape index: {}]
  %s4 = sld [smem:[#allocation0]]
  $region45: #{tpu_custom_call.1} parent=0
    _
  %s6 = ssub.s32 1, %s4
  %s7 = scalar_select 0, %s6, %s4
  $region1: #{tpu_custom_call.1} parent=0
    #allocation2 [shape = 'u8[294912]{0}', space=vmem, size = 0x48000, scoped, tag = 'output window, operand 0']
    #allocation3 [shape = 's32[2]{0}', space=sflag, size = 0x8, scoped, tag = 'scoped memory for tpu_custom_call.1']
    %8 = vsyncpa [#allocation3], 0
    %s9 = scalar_lea.sflag [#allocation3], 1
    %10 = vsyncpa %s9, 0
    loop: start=0, step=1, limit=4
    $region2: #{tpu_custom_call.1} parent=1 // loop_pre_header
      _
    $region3: #{tpu_custom_call.1} parent=1 // loop_header
      %s12 = sphi 0, %s16
      %p13 = scmp.ge.s32.totalorder %s12, 4
      %s19 = sphi 0, %s31
      %s20 = sphi 0, %s27
      %s21 = sphi 0, %s19
      %s22 = sphi 0, %s20
      %s23 = sphi 0, %s21
      %s24 = sphi 0, %s22
      %s34 = sphi 0, %s36
      %s37 = sphi 0, %s34
      %s38 = sphi 0, %s37
      %s54 = sphi 0, %s38
      %s58 = sphi 0, %s58
      %s60 = sphi 0, %s58
      %s61 = sphi 0, %s60
      %s75 = sphi 0, %s61
      %s79 = sphi 0, %s79
      %s81 = sphi 0, %s79
      %s82 = sphi 0, %s81
      %s96 = sphi 0, %s82
      %s104 = sphi 0, %s106
      %s107 = sphi 0, %s104
      %s108 = sphi 0, %s107
      %s124 = sphi 0, %s108
    $region4: #{tpu_custom_call.1} parent=1 // loop_header_branch
      %15 = sbr.rel (%p13) target = $region8
    $region5: #{tpu_custom_call.1} parent=1 // loop_body
      %s17 = ssub.s32 %s12, 1
      %s18 = ssub.s32 %s12, 2
      %s25 = sadd.s32 1, %s20
      %p26 = scmp.ge.s32.totalorder %s25, 1
      %s27 = scalar_select %p26, 0, %s25
      %s28 = sadd.s32 1, %s19
      %s29 = scalar_select %p26, %s28, %s19
      %p30 = scmp.ge.s32.totalorder %s29, 2
      %s31 = scalar_select %p30, 0, %s29
      %s32 = ssub.s32 %s19, %s31
      %p33 = scmp.eq.s32.totalorder %s32, 0
      %s35 = sadd.s32 %s34, 1
      %s36 = scalar_select %p33, %s34, %s35
      %p39 = pneg %p33
      %p40 = scmp.eq.s32.totalorder %s12, 1
      %p41 = por %p39, %p40
      %p42 = scmp.ne.s32.totalorder %s34, %s37
      %p43 = scmp.eq.s32.totalorder %s12, 0
      %p44 = por %p42, %p43
      %p45 = scmp.ne.s32.totalorder %s34, %s37
      %p46 = scmp.eq.s32.totalorder %s17, 1
      %p47 = por %p45, %p46
      %p48 = scmp.ne.s32.totalorder %s37, %s38
      %p49 = scmp.eq.s32.totalorder %s17, 0
      %p50 = por %p48, %p49
      %p51 = scmp.ne.s32.totalorder %s37, %s38
      %p52 = scmp.eq.s32.totalorder %s18, 1
      %p53 = por %p51, %p52
      %p55 = scmp.ne.s32.totalorder %s38, %s54
      %p56 = scmp.eq.s32.totalorder %s18, 0
      %p57 = por %p55, %p56
      %s59 = sadd.s32 %s58, 1
      %p62 = scmp.eq.s32.totalorder %s12, 1
      %p63 = scmp.ne.s32.totalorder %s58, %s60
      %p64 = scmp.eq.s32.totalorder %s12, 0
      %p65 = por %p63, %p64
      %p66 = scmp.ne.s32.totalorder %s58, %s60
      %p67 = scmp.eq.s32.totalorder %s17, 1
      %p68 = por %p66, %p67
      %p69 = scmp.ne.s32.totalorder %s60, %s61
      %p70 = scmp.eq.s32.totalorder %s17, 0
      %p71 = por %p69, %p70
      %p72 = scmp.ne.s32.totalorder %s60, %s61
      %p73 = scmp.eq.s32.totalorder %s18, 1
      %p74 = por %p72, %p73
      %p76 = scmp.ne.s32.totalorder %s61, %s75
      %p77 = scmp.eq.s32.totalorder %s18, 0
      %p78 = por %p76, %p77
      %s80 = sadd.s32 %s79, 1
      %p83 = scmp.eq.s32.totalorder %s12, 1
      %p84 = scmp.ne.s32.totalorder %s79, %s81
      %p85 = scmp.eq.s32.totalorder %s12, 0
      %p86 = por %p84, %p85
      %p87 = scmp.ne.s32.totalorder %s79, %s81
      %p88 = scmp.eq.s32.totalorder %s17, 1
      %p89 = por %p87, %p88
      %p90 = scmp.ne.s32.totalorder %s81, %s82
      %p91 = scmp.eq.s32.totalorder %s17, 0
      %p92 = por %p90, %p91
      %p93 = scmp.ne.s32.totalorder %s81, %s82
      %p94 = scmp.eq.s32.totalorder %s18, 1
      %p95 = por %p93, %p94
      %p97 = scmp.ne.s32.totalorder %s82, %s96
      %p98 = scmp.eq.s32.totalorder %s18, 0
      %p99 = por %p97, %p98
      %s100 = ssub.s32 %s19, %s31
      %s101 = ssub.s32 %s20, %s27
      %s102 = sor.u32 %s100, %s101
      %p103 = scmp.eq.s32.totalorder %s102, 0
      %s105 = sadd.s32 %s104, 1
      %s106 = scalar_select %p103, %s104, %s105
      %p109 = pneg %p103
      %p110 = scmp.eq.s32.totalorder %s12, 1
      %p111 = por %p109, %p110
      %p112 = scmp.ne.s32.totalorder %s104, %s107
      %p113 = scmp.eq.s32.totalorder %s12, 0
      %p114 = por %p112, %p113
      %p115 = scmp.ne.s32.totalorder %s104, %s107
      %p116 = scmp.eq.s32.totalorder %s17, 1
      %p117 = por %p115, %p116
      %p118 = scmp.ne.s32.totalorder %s107, %s108
      %p119 = scmp.eq.s32.totalorder %s17, 0
      %p120 = por %p118, %p119
      %p121 = scmp.ne.s32.totalorder %s107, %s108
      %p122 = scmp.eq.s32.totalorder %s18, 1
      %p123 = por %p121, %p122
      %p125 = scmp.ne.s32.totalorder %s108, %s124
      %p126 = scmp.eq.s32.totalorder %s18, 0
      %p127 = por %p125, %p126
      %p128 = scmp.le.s32.totalorder 1, %s12
      %p129 = scmp.lt.s32.totalorder %s12, 3
      %p130 = pnand %p128, %p129
      %p131 = pneg %p130
      // Predicated region
      $region9: #{tpu_custom_call.1} parent=5 // pred_check
        _
      $region10: #{tpu_custom_call.1} parent=5 // pred_check_branch
        %133 = sbr.rel (%p130) target = $region12
      $region11: #{tpu_custom_call.1} parent=5 // pred_region
        %s134 = ssub.s32 %s12, 1
        // Predicated region
        $region13: #{tpu_custom_call.1} parent=11 // pred_check
          %p135 = pneg %p71
        $region14: #{tpu_custom_call.1} parent=11 // pred_check_branch
          %137 = sbr.rel (%p135) target = $region16
        $region15: #{tpu_custom_call.1} parent=11 // pred_region
          _
        $region16: #{tpu_custom_call.1} parent=11 // pred_fallthru
          _
        // Predicated region
        $region17: #{tpu_custom_call.1} parent=11 // pred_check
          %p138 = pneg %p92
        $region18: #{tpu_custom_call.1} parent=11 // pred_check_branch
          %140 = sbr.rel (%p138) target = $region20
        $region19: #{tpu_custom_call.1} parent=11 // pred_region
          _
        $region20: #{tpu_custom_call.1} parent=11 // pred_fallthru
          _
      $region12: #{tpu_custom_call.1} parent=5 // pred_fallthru
        _
      %p141 = scmp.lt.s32.totalorder %s12, 2
      // Predicated region
      $region21: #{tpu_custom_call.1} parent=5 // pred_check
        %p142 = pneg %p141
      $region22: #{tpu_custom_call.1} parent=5 // pred_check_branch
        %144 = sbr.rel (%p142) target = $region24
      $region23: #{tpu_custom_call.1} parent=5 // pred_region
        // Predicated region
        $region25: #{tpu_custom_call.1} parent=23 // pred_check
          %p145 = pneg %p44
        $region26: #{tpu_custom_call.1} parent=23 // pred_check_branch
          %147 = sbr.rel (%p145) target = $region28
        $region27: #{tpu_custom_call.1} parent=23 // pred_region
          %p148 = scmp.lt.s32.totalorder %s19, 1
          %s149 = scalar_select %p148, %s19, 1
          %s150 = smul.addr %s149, 43
          %s151 = smul.addr %s150, 8
          %s152 = scalar_lea.vmem %s0, %s151
        $region28: #{tpu_custom_call.1} parent=23 // pred_fallthru
          _
      $region24: #{tpu_custom_call.1} parent=5 // pred_fallthru
        _
      %p153 = scmp.le.s32.totalorder 1, %s12
      %p154 = scmp.lt.s32.totalorder %s12, 3
      %p155 = pnand %p153, %p154
      %p156 = pneg %p155
      // Predicated region
      $region29: #{tpu_custom_call.1} parent=5 // pred_check
        _
      $region30: #{tpu_custom_call.1} parent=5 // pred_check_branch
        %158 = sbr.rel (%p155) target = $region32
      $region31: #{tpu_custom_call.1} parent=5 // pred_region
        %s159 = ssub.s32 %s12, 1
        %p160 = scmp.lt.s32.totalorder %s21, 1
        %s161 = scalar_select %p160, %s21, 1
        %s162 = smul.addr %s161, 43
        %s163 = smul.addr %s162, 8
        %s164 = scalar_lea.vmem %s0, %s163
        %p165 = pneg %p50
        %p166 = pneg %p47
        %p167 = pneg %p71
        %p168 = pneg %p68
        %p169 = pneg %p92
        %p170 = pneg %p89
        %p171 = pneg %p120
        %p172 = pneg %p117
        %s173 = sand.u32 %s107, 1
        %s174 = scalar_lea.sflag [#allocation3], %s173
        %s175 = sand.u32 %s107, 1
        %s176 = smul.addr %s175, 288
        %s177 = scalar_lea.vmem [#allocation2], %s176
        %p178 = scmp.lt.s32.totalorder %s21, 1
        %s179 = scalar_select %p178, %s21, 1
        %s180 = smul.addr %s179, 43
        %s181 = smul.addr %s180, 8
        %s182 = scalar_lea.vmem %s0, %s181
        %s183 = smul.u32 36, %s22
        %s184 = smul.u32 %s22, 288
        %s185 = scalar_lea.vmem %s182, %s184
        %v186 = vld [vmem:[%s185] sm:$0xff]
        %v187 = vld [vmem:[%s185 + $0x8] sm:$0xff]
        %v188 = vld [vmem:[%s185 + $0x10] sm:$0xff]
        %v189 = vld [vmem:[%s185 + $0x18] sm:$0xff]
        %v190 = vld [vmem:[%s185 + $0x20] sm:$0xff]
        %v191 = vld [vmem:[%s185 + $0x28] sm:$0xff]
        %v192 = vld [vmem:[%s185 + $0x30] sm:$0xff]
        %v193 = vld [vmem:[%s185 + $0x38] sm:$0xff]
        %v194 = vld [vmem:[%s185 + $0x40] sm:$0xff]
        %v195 = vld [vmem:[%s185 + $0x48] sm:$0xff]
        %v196 = vld [vmem:[%s185 + $0x50] sm:$0xff]
        %v197 = vld [vmem:[%s185 + $0x58] sm:$0xff]
        %v198 = vld [vmem:[%s185 + $0x60] sm:$0xff]
        %v199 = vld [vmem:[%s185 + $0x68] sm:$0xff]
        %v200 = vld [vmem:[%s185 + $0x70] sm:$0xff]
        %v201 = vld [vmem:[%s185 + $0x78] sm:$0xff]
        %v202 = vld [vmem:[%s185 + $0x80] sm:$0xff]
        %v203 = vld [vmem:[%s185 + $0x88] sm:$0xff]
        %v204 = vld [vmem:[%s185 + $0x90] sm:$0xff]
        %v205 = vld [vmem:[%s185 + $0x98] sm:$0xff]
        %v206 = vld [vmem:[%s185 + $0xa0] sm:$0xff]
        %v207 = vld [vmem:[%s185 + $0xa8] sm:$0xff]
        %v208 = vld [vmem:[%s185 + $0xb0] sm:$0xff]
        %v209 = vld [vmem:[%s185 + $0xb8] sm:$0xff]
        %v210 = vld [vmem:[%s185 + $0xc0] sm:$0xff]
        %v211 = vld [vmem:[%s185 + $0xc8] sm:$0xff]
        %v212 = vld [vmem:[%s185 + $0xd0] sm:$0xff]
        %v213 = vld [vmem:[%s185 + $0xd8] sm:$0xff]
        %v214 = vld [vmem:[%s185 + $0xe0] sm:$0xff]
        %v215 = vld [vmem:[%s185 + $0xe8] sm:$0xff]
        %v216 = vld [vmem:[%s185 + $0xf0] sm:$0xff]
        %v217 = vld [vmem:[%s185 + $0xf8] sm:$0xff]
        %v218 = vld [vmem:[%s185 + $0x100] sm:$0xff]
        %v219 = vld [vmem:[%s185 + $0x108] sm:$0xff]
        %v220 = vld [vmem:[%s185 + $0x110] sm:$0xff]
        %v221 = vld [vmem:[%s185 + $0x118] sm:$0xff]
        %v222 = vld [vmem:[%s1] sm:$0xff]
        %s223 = sadd.s32 %s184, 1
        %s224 = scalar_lea.vmem %s182, %s223
        %v225 = vld [vmem:[%s224] sm:$0xff]
        %v226 = vld [vmem:[%s224 + $0x8] sm:$0xff]
        %v227 = vld [vmem:[%s224 + $0x10] sm:$0xff]
        %v228 = vld [vmem:[%s224 + $0x18] sm:$0xff]
        %v229 = vld [vmem:[%s224 + $0x20] sm:$0xff]
        %v230 = vld [vmem:[%s224 + $0x28] sm:$0xff]
        %v231 = vld [vmem:[%s224 + $0x30] sm:$0xff]
        %v232 = vld [vmem:[%s224 + $0x38] sm:$0xff]
        %v233 = vld [vmem:[%s224 + $0x40] sm:$0xff]
        %v234 = vld [vmem:[%s224 + $0x48] sm:$0xff]
        %v235 = vld [vmem:[%s224 + $0x50] sm:$0xff]
        %v236 = vld [vmem:[%s224 + $0x58] sm:$0xff]
        %v237 = vld [vmem:[%s224 + $0x60] sm:$0xff]
        %v238 = vld [vmem:[%s224 + $0x68] sm:$0xff]
        %v239 = vld [vmem:[%s224 + $0x70] sm:$0xff]
        %v240 = vld [vmem:[%s224 + $0x78] sm:$0xff]
        %v241 = vld [vmem:[%s224 + $0x80] sm:$0xff]
        %v242 = vld [vmem:[%s224 + $0x88] sm:$0xff]
        %v243 = vld [vmem:[%s224 + $0x90] sm:$0xff]
        %v244 = vld [vmem:[%s224 + $0x98] sm:$0xff]
        %v245 = vld [vmem:[%s224 + $0xa0] sm:$0xff]
        %v246 = vld [vmem:[%s224 + $0xa8] sm:$0xff]
        %v247 = vld [vmem:[%s224 + $0xb0] sm:$0xff]
        %v248 = vld [vmem:[%s224 + $0xb8] sm:$0xff]
        %v249 = vld [vmem:[%s224 + $0xc0] sm:$0xff]
        %v250 = vld [vmem:[%s224 + $0xc8] sm:$0xff]
        %v251 = vld [vmem:[%s224 + $0xd0] sm:$0xff]
        %v252 = vld [vmem:[%s224 + $0xd8] sm:$0xff]
        %v253 = vld [vmem:[%s224 + $0xe0] sm:$0xff]
        %v254 = vld [vmem:[%s224 + $0xe8] sm:$0xff]
        %v255 = vld [vmem:[%s224 + $0xf0] sm:$0xff]
        %v256 = vld [vmem:[%s224 + $0xf8] sm:$0xff]
        %v257 = vld [vmem:[%s224 + $0x100] sm:$0xff]
        %v258 = vld [vmem:[%s224 + $0x108] sm:$0xff]
        %v259 = vld [vmem:[%s224 + $0x110] sm:$0xff]
        %v260 = vld [vmem:[%s224 + $0x118] sm:$0xff]
        %s261 = scalar_lea.vmem %s1, 8
        %v262 = vld [vmem:[%s261] sm:$0xff]
        %vm263 = vcmask 64512
        %v265 = vsel %vm263, %v225, 0
        %v268 = vsel %vm263, %v226, 0
        %v271 = vsel %vm263, %v227, 0
        %v274 = vsel %vm263, %v228, 0
        %v277 = vsel %vm263, %v229, 0
        %v280 = vsel %vm263, %v230, 0
        %v283 = vsel %vm263, %v231, 0
        %v286 = vsel %vm263, %v232, 0
        %v289 = vsel %vm263, %v233, 0
        %v292 = vsel %vm263, %v234, 0
        %v295 = vsel %vm263, %v235, 0
        %v298 = vsel %vm263, %v236, 0
        %v301 = vsel %vm263, %v237, 0
        %v304 = vsel %vm263, %v238, 0
        %v307 = vsel %vm263, %v239, 0
        %v310 = vsel %vm263, %v240, 0
        %v313 = vsel %vm263, %v241, 0
        %v316 = vsel %vm263, %v242, 0
        %v319 = vsel %vm263, %v243, 0
        %v322 = vsel %vm263, %v244, 0
        %v325 = vsel %vm263, %v245, 0
        %v328 = vsel %vm263, %v246, 0
        %v331 = vsel %vm263, %v247, 0
        %v334 = vsel %vm263, %v248, 0
        %v337 = vsel %vm263, %v249, 0
        %v340 = vsel %vm263, %v250, 0
        %v343 = vsel %vm263, %v251, 0
        %v346 = vsel %vm263, %v252, 0
        %v349 = vsel %vm263, %v253, 0
        %v352 = vsel %vm263, %v254, 0
        %v355 = vsel %vm263, %v255, 0
        %v358 = vsel %vm263, %v256, 0
        %v361 = vsel %vm263, %v257, 0
        %v364 = vsel %vm263, %v258, 0
        %v367 = vsel %vm263, %v259, 0
        %v370 = vsel %vm263, %v260, 0
        %372 = vmatprep.subr.mxu0 0.0
        %373 = vmatpush1.msra.mxu0 0.0
        %374 = vmatprep.subr.mxu0 0.0
        %375 = vmatpush1.msra.mxu0 0.0
        %376 = vmatprep.subr.mxu0 0.0
        %377 = vmatpush1.msra.mxu0 0.0
        %378 = vmatprep.subr.mxu0 0.0
        %379 = vmatpush1.msra.mxu0 0.0
        %380 = vmatprep.subr.mxu0 0.0
        %381 = vmatpush1.msra.mxu0 0.0
        %382 = vmatprep.subr.mxu0 0.0
        %383 = vmatpush1.msra.mxu0 0.0
        %384 = vmatprep.subr.mxu0 0.0
        %385 = vmatpush1.msra.mxu0 0.0
        %386 = vmatprep.subr.mxu0 0.0
        %387 = vmatpush1.msra.mxu0 0.0
        %388 = vmatprep.subr.mxu0 0.0
        %389 = vmatpush1.msra.mxu0 0.0
        %390 = vmatprep.subr.mxu0 0.0
        %391 = vmatpush1.msra.mxu0 0.0
        %392 = vmatprep.subr.mxu0 0.0
        %393 = vmatpush1.msra.mxu0 0.0
        %394 = vmatprep.subr.mxu0 0.0
        %395 = vmatpush1.msra.mxu0 0.0
        %396 = vmatprep.subr.mxu0 0.0
        %397 = vmatpush1.msra.mxu0 0.0
        %398 = vmatprep.subr.mxu0 0.0
        %399 = vmatpush1.msra.mxu0 0.0
        %400 = vmatprep.subr.mxu0 0.0
        %401 = vmatpush1.msra.mxu0 0.0
        %402 = vmatprep.subr.mxu0 0.0
        %403 = vmatpush1.msra.mxu0 %v262
        %404 = vmatprep.subr.mxu0 0.0
        %405 = vmatpush2.msra.mxu0 0.0
        %406 = vmatprep.subr.mxu0 0.0
        %407 = vmatpush2.msra.mxu0 0.0
        %408 = vmatprep.subr.mxu0 0.0
        %409 = vmatpush2.msra.mxu0 0.0
        %410 = vmatprep.subr.mxu0 0.0
        %411 = vmatpush2.msra.mxu0 0.0
        %412 = vmatprep.subr.mxu0 0.0
        %413 = vmatpush2.msra.mxu0 0.0
        %414 = vmatprep.subr.mxu0 0.0
        %415 = vmatpush2.msra.mxu0 0.0
        %416 = vmatprep.subr.mxu0 0.0
        %417 = vmatpush2.msra.mxu0 0.0
        %418 = vmatprep.subr.mxu0 0.0
        %419 = vmatpush2.msra.mxu0 0.0
        %420 = vmatprep.subr.mxu0 0.0
        %421 = vmatpush2.msra.mxu0 0.0
        %422 = vmatprep.subr.mxu0 0.0
        %423 = vmatpush2.msra.mxu0 0.0
        %424 = vmatprep.subr.mxu0 0.0
        %425 = vmatpush2.msra.mxu0 0.0
        %426 = vmatprep.subr.mxu0 0.0
        %427 = vmatpush2.msra.mxu0 0.0
        %428 = vmatprep.subr.mxu0 0.0
        %429 = vmatpush2.msra.mxu0 0.0
        %430 = vmatprep.subr.mxu0 0.0
        %431 = vmatpush2.msra.mxu0 0.0
        %432 = vmatprep.subr.mxu0 0.0
        %433 = vmatpush2.msra.mxu0 0.0
        %434 = vmatprep.subr.mxu0 0.0
        %435 = vmatpush2.msra.mxu0 0.0
        %436 = vmatprep.mubr.f32.mxu0 0.0
        %437 = vmatmul.mubr.f32.gmra.mxu0 %v265
        %v438 = vpop.f32.mrf.mxu0
        %v439 = vadd.f32 0.0, %v438
        %v440 = vpop.f32.mrf.mxu0
        %441 = vmatprep.mubr.f32.mxu0 0.0
        %442 = vmatmul.mubr.f32.gmra.mxu0 %v268
        %v443 = vpop.f32.mrf.mxu0
        %v444 = vadd.f32 0.0, %v443
        %v445 = vpop.f32.mrf.mxu0
        %446 = vmatprep.mubr.f32.mxu0 0.0
        %447 = vmatmul.mubr.f32.gmra.mxu0 %v271
        %v448 = vpop.f32.mrf.mxu0
        %v449 = vadd.f32 0.0, %v448
        %v450 = vpop.f32.mrf.mxu0
        %451 = vmatprep.mubr.f32.mxu0 0.0
        %452 = vmatmul.mubr.f32.gmra.mxu0 %v274
        %v453 = vpop.f32.mrf.mxu0
        %v454 = vadd.f32 0.0, %v453
        %v455 = vpop.f32.mrf.mxu0
        %456 = vmatprep.mubr.f32.mxu0 0.0
        %457 = vmatmul.mubr.f32.gmra.mxu0 %v277
        %v458 = vpop.f32.mrf.mxu0
        %v459 = vadd.f32 0.0, %v458
        %v460 = vpop.f32.mrf.mxu0
        %461 = vmatprep.mubr.f32.mxu0 0.0
        %462 = vmatmul.mubr.f32.gmra.mxu0 %v280
        %v463 = vpop.f32.mrf.mxu0
        %v464 = vadd.f32 0.0, %v463
        %v465 = vpop.f32.mrf.mxu0
        %466 = vmatprep.mubr.f32.mxu0 0.0
        %467 = vmatmul.mubr.f32.gmra.mxu0 %v283
        %v468 = vpop.f32.mrf.mxu0
        %v469 = vadd.f32 0.0, %v468
        %v470 = vpop.f32.mrf.mxu0
        %471 = vmatprep.mubr.f32.mxu0 0.0
        %472 = vmatmul.mubr.f32.gmra.mxu0 %v286
        %v473 = vpop.f32.mrf.mxu0
        %v474 = vadd.f32 0.0, %v473
        %v475 = vpop.f32.mrf.mxu0
        %476 = vmatprep.mubr.f32.mxu0 0.0
        %477 = vmatmul.mubr.f32.gmra.mxu0 %v289
        %v478 = vpop.f32.mrf.mxu0
        %v479 = vadd.f32 0.0, %v478
        %v480 = vpop.f32.mrf.mxu0
        %481 = vmatprep.mubr.f32.mxu0 0.0
        %482 = vmatmul.mubr.f32.gmra.mxu0 %v292
        %v483 = vpop.f32.mrf.mxu0
        %v484 = vadd.f32 0.0, %v483
        %v485 = vpop.f32.mrf.mxu0
        %486 = vmatprep.mubr.f32.mxu0 0.0
        %487 = vmatmul.mubr.f32.gmra.mxu0 %v295
        %v488 = vpop.f32.mrf.mxu0
        %v489 = vadd.f32 0.0, %v488
        %v490 = vpop.f32.mrf.mxu0
        %491 = vmatprep.mubr.f32.mxu0 0.0
        %492 = vmatmul.mubr.f32.gmra.mxu0 %v298
        %v493 = vpop.f32.mrf.mxu0
        %v494 = vadd.f32 0.0, %v493
        %v495 = vpop.f32.mrf.mxu0
        %496 = vmatprep.mubr.f32.mxu0 0.0
        %497 = vmatmul.mubr.f32.gmra.mxu0 %v301
        %v498 = vpop.f32.mrf.mxu0
        %v499 = vadd.f32 0.0, %v498
        %v500 = vpop.f32.mrf.mxu0
        %501 = vmatprep.mubr.f32.mxu0 0.0
        %502 = vmatmul.mubr.f32.gmra.mxu0 %v304
        %v503 = vpop.f32.mrf.mxu0
        %v504 = vadd.f32 0.0, %v503
        %v505 = vpop.f32.mrf.mxu0
        %506 = vmatprep.mubr.f32.mxu0 0.0
        %507 = vmatmul.mubr.f32.gmra.mxu0 %v307
        %v508 = vpop.f32.mrf.mxu0
        %v509 = vadd.f32 0.0, %v508
        %v510 = vpop.f32.mrf.mxu0
        %511 = vmatprep.mubr.f32.mxu0 0.0
        %512 = vmatmul.mubr.f32.gmra.mxu0 %v310
        %v513 = vpop.f32.mrf.mxu0
        %v514 = vadd.f32 0.0, %v513
        %v515 = vpop.f32.mrf.mxu0
        %516 = vmatprep.mubr.f32.mxu0 0.0
        %517 = vmatmul.mubr.f32.gmra.mxu0 %v313
        %v518 = vpop.f32.mrf.mxu0
        %v519 = vadd.f32 0.0, %v518
        %v520 = vpop.f32.mrf.mxu0
        %521 = vmatprep.mubr.f32.mxu0 0.0
        %522 = vmatmul.mubr.f32.gmra.mxu0 %v316
        %v523 = vpop.f32.mrf.mxu0
        %v524 = vadd.f32 0.0, %v523
        %v525 = vpop.f32.mrf.mxu0
        %526 = vmatprep.mubr.f32.mxu0 0.0
        %527 = vmatmul.mubr.f32.gmra.mxu0 %v319
        %v528 = vpop.f32.mrf.mxu0
        %v529 = vadd.f32 0.0, %v528
        %v530 = vpop.f32.mrf.mxu0
        %531 = vmatprep.mubr.f32.mxu0 0.0
        %532 = vmatmul.mubr.f32.gmra.mxu0 %v322
        %v533 = vpop.f32.mrf.mxu0
        %v534 = vadd.f32 0.0, %v533
        %v535 = vpop.f32.mrf.mxu0
        %536 = vmatprep.mubr.f32.mxu0 0.0
        %537 = vmatmul.mubr.f32.gmra.mxu0 %v325
        %v538 = vpop.f32.mrf.mxu0
        %v539 = vadd.f32 0.0, %v538
        %v540 = vpop.f32.mrf.mxu0
        %541 = vmatprep.mubr.f32.mxu0 0.0
        %542 = vmatmul.mubr.f32.gmra.mxu0 %v328
        %v543 = vpop.f32.mrf.mxu0
        %v544 = vadd.f32 0.0, %v543
        %v545 = vpop.f32.mrf.mxu0
        %546 = vmatprep.mubr.f32.mxu0 0.0
        %547 = vmatmul.mubr.f32.gmra.mxu0 %v331
        %v548 = vpop.f32.mrf.mxu0
        %v549 = vadd.f32 0.0, %v548
        %v550 = vpop.f32.mrf.mxu0
        %551 = vmatprep.mubr.f32.mxu0 0.0
        %552 = vmatmul.mubr.f32.gmra.mxu0 %v334
        %v553 = vpop.f32.mrf.mxu0
        %v554 = vadd.f32 0.0, %v553
        %v555 = vpop.f32.mrf.mxu0
        %556 = vmatprep.mubr.f32.mxu0 0.0
        %557 = vmatmul.mubr.f32.gmra.mxu0 %v337
        %v558 = vpop.f32.mrf.mxu0
        %v559 = vadd.f32 0.0, %v558
        %v560 = vpop.f32.mrf.mxu0
        %561 = vmatprep.mubr.f32.mxu0 0.0
        %562 = vmatmul.mubr.f32.gmra.mxu0 %v340
        %v563 = vpop.f32.mrf.mxu0
        %v564 = vadd.f32 0.0, %v563
        %v565 = vpop.f32.mrf.mxu0
        %566 = vmatprep.mubr.f32.mxu0 0.0
        %567 = vmatmul.mubr.f32.gmra.mxu0 %v343
        %v568 = vpop.f32.mrf.mxu0
        %v569 = vadd.f32 0.0, %v568
        %v570 = vpop.f32.mrf.mxu0
        %571 = vmatprep.mubr.f32.mxu0 0.0
        %572 = vmatmul.mubr.f32.gmra.mxu0 %v346
        %v573 = vpop.f32.mrf.mxu0
        %v574 = vadd.f32 0.0, %v573
        %v575 = vpop.f32.mrf.mxu0
        %576 = vmatprep.mubr.f32.mxu0 0.0
        %577 = vmatmul.mubr.f32.gmra.mxu0 %v349
        %v578 = vpop.f32.mrf.mxu0
        %v579 = vadd.f32 0.0, %v578
        %v580 = vpop.f32.mrf.mxu0
        %581 = vmatprep.mubr.f32.mxu0 0.0
        %582 = vmatmul.mubr.f32.gmra.mxu0 %v352
        %v583 = vpop.f32.mrf.mxu0
        %v584 = vadd.f32 0.0, %v583
        %v585 = vpop.f32.mrf.mxu0
        %586 = vmatprep.mubr.f32.mxu0 0.0
        %587 = vmatmul.mubr.f32.gmra.mxu0 %v355
        %v588 = vpop.f32.mrf.mxu0
        %v589 = vadd.f32 0.0, %v588
        %v590 = vpop.f32.mrf.mxu0
        %591 = vmatprep.mubr.f32.mxu0 0.0
        %592 = vmatmul.mubr.f32.gmra.mxu0 %v358
        %v593 = vpop.f32.mrf.mxu0
        %v594 = vadd.f32 0.0, %v593
        %v595 = vpop.f32.mrf.mxu0
        %596 = vmatprep.mubr.f32.mxu0 0.0
        %597 = vmatmul.mubr.f32.gmra.mxu0 %v361
        %v598 = vpop.f32.mrf.mxu0
        %v599 = vadd.f32 0.0, %v598
        %v600 = vpop.f32.mrf.mxu0
        %601 = vmatprep.mubr.f32.mxu0 0.0
        %602 = vmatmul.mubr.f32.gmra.mxu0 %v364
        %v603 = vpop.f32.mrf.mxu0
        %v604 = vadd.f32 0.0, %v603
        %v605 = vpop.f32.mrf.mxu0
        %606 = vmatprep.mubr.f32.mxu0 0.0
        %607 = vmatmul.mubr.f32.gmra.mxu0 %v367
        %v608 = vpop.f32.mrf.mxu0
        %v609 = vadd.f32 0.0, %v608
        %v610 = vpop.f32.mrf.mxu0
        %611 = vmatprep.mubr.f32.mxu0 0.0
        %612 = vmatmul.mubr.f32.gmra.mxu0 %v370
        %v613 = vpop.f32.mrf.mxu0
        %v614 = vadd.f32 0.0, %v613
        %v615 = vpop.f32.mrf.mxu0
        %616 = vdwg.mxu0
        %v618 = vsel %vm263, %v186, 0
        %v621 = vsel %vm263, %v187, 0
        %v624 = vsel %vm263, %v188, 0
        %v627 = vsel %vm263, %v189, 0
        %v630 = vsel %vm263, %v190, 0
        %v633 = vsel %vm263, %v191, 0
        %v636 = vsel %vm263, %v192, 0
        %v639 = vsel %vm263, %v193, 0
        %v642 = vsel %vm263, %v194, 0
        %v645 = vsel %vm263, %v195, 0
        %v648 = vsel %vm263, %v196, 0
        %v651 = vsel %vm263, %v197, 0
        %v654 = vsel %vm263, %v198, 0
        %v657 = vsel %vm263, %v199, 0
        %v660 = vsel %vm263, %v200, 0
        %v663 = vsel %vm263, %v201, 0
        %v666 = vsel %vm263, %v202, 0
        %v669 = vsel %vm263, %v203, 0
        %v672 = vsel %vm263, %v204, 0
        %v675 = vsel %vm263, %v205, 0
        %v678 = vsel %vm263, %v206, 0
        %v681 = vsel %vm263, %v207, 0
        %v684 = vsel %vm263, %v208, 0
        %v687 = vsel %vm263, %v209, 0
        %v690 = vsel %vm263, %v210, 0
        %v693 = vsel %vm263, %v211, 0
        %v696 = vsel %vm263, %v212, 0
        %v699 = vsel %vm263, %v213, 0
        %v702 = vsel %vm263, %v214, 0
        %v705 = vsel %vm263, %v215, 0
        %v708 = vsel %vm263, %v216, 0
        %v711 = vsel %vm263, %v217, 0
        %v714 = vsel %vm263, %v218, 0
        %v717 = vsel %vm263, %v219, 0
        %v720 = vsel %vm263, %v220, 0
        %v723 = vsel %vm263, %v221, 0
        %725 = vmatprep.subr.mxu0 0.0
        %726 = vmatpush1.msra.mxu0 0.0
        %727 = vmatprep.subr.mxu0 0.0
        %728 = vmatpush1.msra.mxu0 0.0
        %729 = vmatprep.subr.mxu0 0.0
        %730 = vmatpush1.msra.mxu0 0.0
        %731 = vmatprep.subr.mxu0 0.0
        %732 = vmatpush1.msra.mxu0 0.0
        %733 = vmatprep.subr.mxu0 0.0
        %734 = vmatpush1.msra.mxu0 0.0
        %735 = vmatprep.subr.mxu0 0.0
        %736 = vmatpush1.msra.mxu0 0.0
        %737 = vmatprep.subr.mxu0 0.0
        %738 = vmatpush1.msra.mxu0 0.0
        %739 = vmatprep.subr.mxu0 0.0
        %740 = vmatpush1.msra.mxu0 0.0
        %741 = vmatprep.subr.mxu0 0.0
        %742 = vmatpush1.msra.mxu0 0.0
        %743 = vmatprep.subr.mxu0 0.0
        %744 = vmatpush1.msra.mxu0 0.0
        %745 = vmatprep.subr.mxu0 0.0
        %746 = vmatpush1.msra.mxu0 0.0
        %747 = vmatprep.subr.mxu0 0.0
        %748 = vmatpush1.msra.mxu0 0.0
        %749 = vmatprep.subr.mxu0 0.0
        %750 = vmatpush1.msra.mxu0 0.0
        %751 = vmatprep.subr.mxu0 0.0
        %752 = vmatpush1.msra.mxu0 0.0
        %753 = vmatprep.subr.mxu0 0.0
        %754 = vmatpush1.msra.mxu0 0.0
        %755 = vmatprep.subr.mxu0 0.0
        %756 = vmatpush1.msra.mxu0 %v222
        %757 = vmatprep.subr.mxu0 0.0
        %758 = vmatpush2.msra.mxu0 0.0
        %759 = vmatprep.subr.mxu0 0.0
        %760 = vmatpush2.msra.mxu0 0.0
        %761 = vmatprep.subr.mxu0 0.0
        %762 = vmatpush2.msra.mxu0 0.0
        %763 = vmatprep.subr.mxu0 0.0
        %764 = vmatpush2.msra.mxu0 0.0
        %765 = vmatprep.subr.mxu0 0.0
        %766 = vmatpush2.msra.mxu0 0.0
        %767 = vmatprep.subr.mxu0 0.0
        %768 = vmatpush2.msra.mxu0 0.0
        %769 = vmatprep.subr.mxu0 0.0
        %770 = vmatpush2.msra.mxu0 0.0
        %771 = vmatprep.subr.mxu0 0.0
        %772 = vmatpush2.msra.mxu0 0.0
        %773 = vmatprep.subr.mxu0 0.0
        %774 = vmatpush2.msra.mxu0 0.0
        %775 = vmatprep.subr.mxu0 0.0
        %776 = vmatpush2.msra.mxu0 0.0
        %777 = vmatprep.subr.mxu0 0.0
        %778 = vmatpush2.msra.mxu0 0.0
        %779 = vmatprep.subr.mxu0 0.0
        %780 = vmatpush2.msra.mxu0 0.0
        %781 = vmatprep.subr.mxu0 0.0
        %782 = vmatpush2.msra.mxu0 0.0
        %783 = vmatprep.subr.mxu0 0.0
        %784 = vmatpush2.msra.mxu0 0.0
        %785 = vmatprep.subr.mxu0 0.0
        %786 = vmatpush2.msra.mxu0 0.0
        %787 = vmatprep.subr.mxu0 0.0
        %788 = vmatpush2.msra.mxu0 0.0
        %789 = vmatprep.mubr.f32.mxu0 0.0
        %790 = vmatmul.mubr.f32.gmra.mxu0 %v618
        %v791 = vpop.f32.mrf.mxu0
        %v792 = vadd.f32 %v439, %v791
        %v793 = vpop.f32.mrf.mxu0
        %794 = vmatprep.mubr.f32.mxu0 0.0
        %795 = vmatmul.mubr.f32.gmra.mxu0 %v621
        %v796 = vpop.f32.mrf.mxu0
        %v797 = vadd.f32 %v444, %v796
        %v798 = vpop.f32.mrf.mxu0
        %799 = vmatprep.mubr.f32.mxu0 0.0
        %800 = vmatmul.mubr.f32.gmra.mxu0 %v624
        %v801 = vpop.f32.mrf.mxu0
        %v802 = vadd.f32 %v449, %v801
        %v803 = vpop.f32.mrf.mxu0
        %804 = vmatprep.mubr.f32.mxu0 0.0
        %805 = vmatmul.mubr.f32.gmra.mxu0 %v627
        %v806 = vpop.f32.mrf.mxu0
        %v807 = vadd.f32 %v454, %v806
        %v808 = vpop.f32.mrf.mxu0
        %809 = vmatprep.mubr.f32.mxu0 0.0
        %810 = vmatmul.mubr.f32.gmra.mxu0 %v630
        %v811 = vpop.f32.mrf.mxu0
        %v812 = vadd.f32 %v459, %v811
        %v813 = vpop.f32.mrf.mxu0
        %814 = vmatprep.mubr.f32.mxu0 0.0
        %815 = vmatmul.mubr.f32.gmra.mxu0 %v633
        %v816 = vpop.f32.mrf.mxu0
        %v817 = vadd.f32 %v464, %v816
        %v818 = vpop.f32.mrf.mxu0
        %819 = vmatprep.mubr.f32.mxu0 0.0
        %820 = vmatmul.mubr.f32.gmra.mxu0 %v636
        %v821 = vpop.f32.mrf.mxu0
        %v822 = vadd.f32 %v469, %v821
        %v823 = vpop.f32.mrf.mxu0
        %824 = vmatprep.mubr.f32.mxu0 0.0
        %825 = vmatmul.mubr.f32.gmra.mxu0 %v639
        %v826 = vpop.f32.mrf.mxu0
        %v827 = vadd.f32 %v474, %v826
        %v828 = vpop.f32.mrf.mxu0
        %829 = vmatprep.mubr.f32.mxu0 0.0
        %830 = vmatmul.mubr.f32.gmra.mxu0 %v642
        %v831 = vpop.f32.mrf.mxu0
        %v832 = vadd.f32 %v479, %v831
        %v833 = vpop.f32.mrf.mxu0
        %834 = vmatprep.mubr.f32.mxu0 0.0
        %835 = vmatmul.mubr.f32.gmra.mxu0 %v645
        %v836 = vpop.f32.mrf.mxu0
        %v837 = vadd.f32 %v484, %v836
        %v838 = vpop.f32.mrf.mxu0
        %839 = vmatprep.mubr.f32.mxu0 0.0
        %840 = vmatmul.mubr.f32.gmra.mxu0 %v648
        %v841 = vpop.f32.mrf.mxu0
        %v842 = vadd.f32 %v489, %v841
        %v843 = vpop.f32.mrf.mxu0
        %844 = vmatprep.mubr.f32.mxu0 0.0
        %845 = vmatmul.mubr.f32.gmra.mxu0 %v651
        %v846 = vpop.f32.mrf.mxu0
        %v847 = vadd.f32 %v494, %v846
        %v848 = vpop.f32.mrf.mxu0
        %849 = vmatprep.mubr.f32.mxu0 0.0
        %850 = vmatmul.mubr.f32.gmra.mxu0 %v654
        %v851 = vpop.f32.mrf.mxu0
        %v852 = vadd.f32 %v499, %v851
        %v853 = vpop.f32.mrf.mxu0
        %854 = vmatprep.mubr.f32.mxu0 0.0
        %855 = vmatmul.mubr.f32.gmra.mxu0 %v657
        %v856 = vpop.f32.mrf.mxu0
        %v857 = vadd.f32 %v504, %v856
        %v858 = vpop.f32.mrf.mxu0
        %859 = vmatprep.mubr.f32.mxu0 0.0
        %860 = vmatmul.mubr.f32.gmra.mxu0 %v660
        %v861 = vpop.f32.mrf.mxu0
        %v862 = vadd.f32 %v509, %v861
        %v863 = vpop.f32.mrf.mxu0
        %864 = vmatprep.mubr.f32.mxu0 0.0
        %865 = vmatmul.mubr.f32.gmra.mxu0 %v663
        %v866 = vpop.f32.mrf.mxu0
        %v867 = vadd.f32 %v514, %v866
        %v868 = vpop.f32.mrf.mxu0
        %869 = vmatprep.mubr.f32.mxu0 0.0
        %870 = vmatmul.mubr.f32.gmra.mxu0 %v666
        %v871 = vpop.f32.mrf.mxu0
        %v872 = vadd.f32 %v519, %v871
        %v873 = vpop.f32.mrf.mxu0
        %874 = vmatprep.mubr.f32.mxu0 0.0
        %875 = vmatmul.mubr.f32.gmra.mxu0 %v669
        %v876 = vpop.f32.mrf.mxu0
        %v877 = vadd.f32 %v524, %v876
        %v878 = vpop.f32.mrf.mxu0
        %879 = vmatprep.mubr.f32.mxu0 0.0
        %880 = vmatmul.mubr.f32.gmra.mxu0 %v672
        %v881 = vpop.f32.mrf.mxu0
        %v882 = vadd.f32 %v529, %v881
        %v883 = vpop.f32.mrf.mxu0
        %884 = vmatprep.mubr.f32.mxu0 0.0
        %885 = vmatmul.mubr.f32.gmra.mxu0 %v675
        %v886 = vpop.f32.mrf.mxu0
        %v887 = vadd.f32 %v534, %v886
        %v888 = vpop.f32.mrf.mxu0
        %889 = vmatprep.mubr.f32.mxu0 0.0
        %890 = vmatmul.mubr.f32.gmra.mxu0 %v678
        %v891 = vpop.f32.mrf.mxu0
        %v892 = vadd.f32 %v539, %v891
        %v893 = vpop.f32.mrf.mxu0
        %894 = vmatprep.mubr.f32.mxu0 0.0
        %895 = vmatmul.mubr.f32.gmra.mxu0 %v681
        %v896 = vpop.f32.mrf.mxu0
        %v897 = vadd.f32 %v544, %v896
        %v898 = vpop.f32.mrf.mxu0
        %899 = vmatprep.mubr.f32.mxu0 0.0
        %900 = vmatmul.mubr.f32.gmra.mxu0 %v684
        %v901 = vpop.f32.mrf.mxu0
        %v902 = vadd.f32 %v549, %v901
        %v903 = vpop.f32.mrf.mxu0
        %904 = vmatprep.mubr.f32.mxu0 0.0
        %905 = vmatmul.mubr.f32.gmra.mxu0 %v687
        %v906 = vpop.f32.mrf.mxu0
        %v907 = vadd.f32 %v554, %v906
        %v908 = vpop.f32.mrf.mxu0
        %909 = vmatprep.mubr.f32.mxu0 0.0
        %910 = vmatmul.mubr.f32.gmra.mxu0 %v690
        %v911 = vpop.f32.mrf.mxu0
        %v912 = vadd.f32 %v559, %v911
        %v913 = vpop.f32.mrf.mxu0
        %914 = vmatprep.mubr.f32.mxu0 0.0
        %915 = vmatmul.mubr.f32.gmra.mxu0 %v693
        %v916 = vpop.f32.mrf.mxu0
        %v917 = vadd.f32 %v564, %v916
        %v918 = vpop.f32.mrf.mxu0
        %919 = vmatprep.mubr.f32.mxu0 0.0
        %920 = vmatmul.mubr.f32.gmra.mxu0 %v696
        %v921 = vpop.f32.mrf.mxu0
        %v922 = vadd.f32 %v569, %v921
        %v923 = vpop.f32.mrf.mxu0
        %924 = vmatprep.mubr.f32.mxu0 0.0
        %925 = vmatmul.mubr.f32.gmra.mxu0 %v699
        %v926 = vpop.f32.mrf.mxu0
        %v927 = vadd.f32 %v574, %v926
        %v928 = vpop.f32.mrf.mxu0
        %929 = vmatprep.mubr.f32.mxu0 0.0
        %930 = vmatmul.mubr.f32.gmra.mxu0 %v702
        %v931 = vpop.f32.mrf.mxu0
        %v932 = vadd.f32 %v579, %v931
        %v933 = vpop.f32.mrf.mxu0
        %934 = vmatprep.mubr.f32.mxu0 0.0
        %935 = vmatmul.mubr.f32.gmra.mxu0 %v705
        %v936 = vpop.f32.mrf.mxu0
        %v937 = vadd.f32 %v584, %v936
        %v938 = vpop.f32.mrf.mxu0
        %939 = vmatprep.mubr.f32.mxu0 0.0
        %940 = vmatmul.mubr.f32.gmra.mxu0 %v708
        %v941 = vpop.f32.mrf.mxu0
        %v942 = vadd.f32 %v589, %v941
        %v943 = vpop.f32.mrf.mxu0
        %944 = vmatprep.mubr.f32.mxu0 0.0
        %945 = vmatmul.mubr.f32.gmra.mxu0 %v711
        %v946 = vpop.f32.mrf.mxu0
        %v947 = vadd.f32 %v594, %v946
        %v948 = vpop.f32.mrf.mxu0
        %949 = vmatprep.mubr.f32.mxu0 0.0
        %950 = vmatmul.mubr.f32.gmra.mxu0 %v714
        %v951 = vpop.f32.mrf.mxu0
        %v952 = vadd.f32 %v599, %v951
        %v953 = vpop.f32.mrf.mxu0
        %954 = vmatprep.mubr.f32.mxu0 0.0
        %955 = vmatmul.mubr.f32.gmra.mxu0 %v717
        %v956 = vpop.f32.mrf.mxu0
        %v957 = vadd.f32 %v604, %v956
        %v958 = vpop.f32.mrf.mxu0
        %959 = vmatprep.mubr.f32.mxu0 0.0
        %960 = vmatmul.mubr.f32.gmra.mxu0 %v720
        %v961 = vpop.f32.mrf.mxu0
        %v962 = vadd.f32 %v609, %v961
        %v963 = vpop.f32.mrf.mxu0
        %964 = vmatprep.mubr.f32.mxu0 0.0
        %965 = vmatmul.mubr.f32.gmra.mxu0 %v723
        %v966 = vpop.f32.mrf.mxu0
        %v967 = vadd.f32 %v614, %v966
        %v968 = vpop.f32.mrf.mxu0
        %969 = vdwg.mxu0
        %s970 = sadd.s32 %s184, 18
        %s971 = scalar_lea.vmem %s182, %s970
        %v972 = vld [vmem:[%s971] sm:$0xff]
        %v973 = vld [vmem:[%s971 + $0x8] sm:$0xff]
        %v974 = vld [vmem:[%s971 + $0x10] sm:$0xff]
        %v975 = vld [vmem:[%s971 + $0x18] sm:$0xff]
        %v976 = vld [vmem:[%s971 + $0x20] sm:$0xff]
        %v977 = vld [vmem:[%s971 + $0x28] sm:$0xff]
        %v978 = vld [vmem:[%s971 + $0x30] sm:$0xff]
        %v979 = vld [vmem:[%s971 + $0x38] sm:$0xff]
        %v980 = vld [vmem:[%s971 + $0x40] sm:$0xff]
        %v981 = vld [vmem:[%s971 + $0x48] sm:$0xff]
        %v982 = vld [vmem:[%s971 + $0x50] sm:$0xff]
        %v983 = vld [vmem:[%s971 + $0x58] sm:$0xff]
        %v984 = vld [vmem:[%s971 + $0x60] sm:$0xff]
        %v985 = vld [vmem:[%s971 + $0x68] sm:$0xff]
        %v986 = vld [vmem:[%s971 + $0x70] sm:$0xff]
        %v987 = vld [vmem:[%s971 + $0x78] sm:$0xff]
        %v988 = vld [vmem:[%s971 + $0x80] sm:$0xff]
        %v989 = vld [vmem:[%s971 + $0x88] sm:$0xff]
        %v990 = vld [vmem:[%s971 + $0x90] sm:$0xff]
        %v991 = vld [vmem:[%s971 + $0x98] sm:$0xff]
        %v992 = vld [vmem:[%s971 + $0xa0] sm:$0xff]
        %v993 = vld [vmem:[%s971 + $0xa8] sm:$0xff]
        %v994 = vld [vmem:[%s971 + $0xb0] sm:$0xff]
        %v995 = vld [vmem:[%s971 + $0xb8] sm:$0xff]
        %v996 = vld [vmem:[%s971 + $0xc0] sm:$0xff]
        %v997 = vld [vmem:[%s971 + $0xc8] sm:$0xff]
        %v998 = vld [vmem:[%s971 + $0xd0] sm:$0xff]
        %v999 = vld [vmem:[%s971 + $0xd8] sm:$0xff]
        %v1000 = vld [vmem:[%s971 + $0xe0] sm:$0xff]
        %v1001 = vld [vmem:[%s971 + $0xe8] sm:$0xff]
        %v1002 = vld [vmem:[%s971 + $0xf0] sm:$0xff]
        %v1003 = vld [vmem:[%s971 + $0xf8] sm:$0xff]
        %v1004 = vld [vmem:[%s971 + $0x100] sm:$0xff]
        %v1005 = vld [vmem:[%s971 + $0x108] sm:$0xff]
        %v1006 = vld [vmem:[%s971 + $0x110] sm:$0xff]
        %v1007 = vld [vmem:[%s971 + $0x118] sm:$0xff]
        %s1008 = scalar_lea.vmem %s1, 16
        %v1009 = vld [vmem:[%s1008] sm:$0xff]
        %v1011 = vsel %vm263, %v972, 0
        %v1014 = vsel %vm263, %v973, 0
        %v1017 = vsel %vm263, %v974, 0
        %v1020 = vsel %vm263, %v975, 0
        %v1023 = vsel %vm263, %v976, 0
        %v1026 = vsel %vm263, %v977, 0
        %v1029 = vsel %vm263, %v978, 0
        %v1032 = vsel %vm263, %v979, 0
        %v1035 = vsel %vm263, %v980, 0
        %v1038 = vsel %vm263, %v981, 0
        %v1041 = vsel %vm263, %v982, 0
        %v1044 = vsel %vm263, %v983, 0
        %v1047 = vsel %vm263, %v984, 0
        %v1050 = vsel %vm263, %v985, 0
        %v1053 = vsel %vm263, %v986, 0
        %v1056 = vsel %vm263, %v987, 0
        %v1059 = vsel %vm263, %v988, 0
        %v1062 = vsel %vm263, %v989, 0
        %v1065 = vsel %vm263, %v990, 0
        %v1068 = vsel %vm263, %v991, 0
        %v1071 = vsel %vm263, %v992, 0
        %v1074 = vsel %vm263, %v993, 0
        %v1077 = vsel %vm263, %v994, 0
        %v1080 = vsel %vm263, %v995, 0
        %v1083 = vsel %vm263, %v996, 0
        %v1086 = vsel %vm263, %v997, 0
        %v1089 = vsel %vm263, %v998, 0
        %v1092 = vsel %vm263, %v999, 0
        %v1095 = vsel %vm263, %v1000, 0
        %v1098 = vsel %vm263, %v1001, 0
        %v1101 = vsel %vm263, %v1002, 0
        %v1104 = vsel %vm263, %v1003, 0
        %v1107 = vsel %vm263, %v1004, 0
        %v1110 = vsel %vm263, %v1005, 0
        %v1113 = vsel %vm263, %v1006, 0
        %v1116 = vsel %vm263, %v1007, 0
        %1118 = vmatprep.subr.mxu0 0.0
        %1119 = vmatpush1.msra.mxu0 0.0
        %1120 = vmatprep.subr.mxu0 0.0
        %1121 = vmatpush1.msra.mxu0 0.0
        %1122 = vmatprep.subr.mxu0 0.0
        %1123 = vmatpush1.msra.mxu0 0.0
        %1124 = vmatprep.subr.mxu0 0.0
        %1125 = vmatpush1.msra.mxu0 0.0
        %1126 = vmatprep.subr.mxu0 0.0
        %1127 = vmatpush1.msra.mxu0 0.0
        %1128 = vmatprep.subr.mxu0 0.0
        %1129 = vmatpush1.msra.mxu0 0.0
        %1130 = vmatprep.subr.mxu0 0.0
        %1131 = vmatpush1.msra.mxu0 0.0
        %1132 = vmatprep.subr.mxu0 0.0
        %1133 = vmatpush1.msra.mxu0 0.0
        %1134 = vmatprep.subr.mxu0 0.0
        %1135 = vmatpush1.msra.mxu0 0.0
        %1136 = vmatprep.subr.mxu0 0.0
        %1137 = vmatpush1.msra.mxu0 0.0
        %1138 = vmatprep.subr.mxu0 0.0
        %1139 = vmatpush1.msra.mxu0 0.0
        %1140 = vmatprep.subr.mxu0 0.0
        %1141 = vmatpush1.msra.mxu0 0.0
        %1142 = vmatprep.subr.mxu0 0.0
        %1143 = vmatpush1.msra.mxu0 0.0
        %1144 = vmatprep.subr.mxu0 0.0
        %1145 = vmatpush1.msra.mxu0 0.0
        %1146 = vmatprep.subr.mxu0 0.0
        %1147 = vmatpush1.msra.mxu0 0.0
        %1148 = vmatprep.subr.mxu0 0.0
        %1149 = vmatpush1.msra.mxu0 %v1009
        %1150 = vmatprep.subr.mxu0 0.0
        %1151 = vmatpush2.msra.mxu0 0.0
        %1152 = vmatprep.subr.mxu0 0.0
        %1153 = vmatpush2.msra.mxu0 0.0
        %1154 = vmatprep.subr.mxu0 0.0
        %1155 = vmatpush2.msra.mxu0 0.0
        %1156 = vmatprep.subr.mxu0 0.0
        %1157 = vmatpush2.msra.mxu0 0.0
        %1158 = vmatprep.subr.mxu0 0.0
        %1159 = vmatpush2.msra.mxu0 0.0
        %1160 = vmatprep.subr.mxu0 0.0
        %1161 = vmatpush2.msra.mxu0 0.0
        %1162 = vmatprep.subr.mxu0 0.0
        %1163 = vmatpush2.msra.mxu0 0.0
        %1164 = vmatprep.subr.mxu0 0.0
        %1165 = vmatpush2.msra.mxu0 0.0
        %1166 = vmatprep.subr.mxu0 0.0
        %1167 = vmatpush2.msra.mxu0 0.0
        %1168 = vmatprep.subr.mxu0 0.0
        %1169 = vmatpush2.msra.mxu0 0.0
        %1170 = vmatprep.subr.mxu0 0.0
        %1171 = vmatpush2.msra.mxu0 0.0
        %1172 = vmatprep.subr.mxu0 0.0
        %1173 = vmatpush2.msra.mxu0 0.0
        %1174 = vmatprep.subr.mxu0 0.0
        %1175 = vmatpush2.msra.mxu0 0.0
        %1176 = vmatprep.subr.mxu0 0.0
        %1177 = vmatpush2.msra.mxu0 0.0
        %1178 = vmatprep.subr.mxu0 0.0
        %1179 = vmatpush2.msra.mxu0 0.0
        %1180 = vmatprep.subr.mxu0 0.0
        %1181 = vmatpush2.msra.mxu0 0.0
        %1182 = vmatprep.mubr.f32.mxu0 0.0
        %1183 = vmatmul.mubr.f32.gmra.mxu0 %v1011
        %v1184 = vpop.f32.mrf.mxu0
        %v1185 = vadd.f32 0.0, %v1184
        %v1186 = vpop.f32.mrf.mxu0
        %1187 = vmatprep.mubr.f32.mxu0 0.0
        %1188 = vmatmul.mubr.f32.gmra.mxu0 %v1014
        %v1189 = vpop.f32.mrf.mxu0
        %v1190 = vadd.f32 0.0, %v1189
        %v1191 = vpop.f32.mrf.mxu0
        %1192 = vmatprep.mubr.f32.mxu0 0.0
        %1193 = vmatmul.mubr.f32.gmra.mxu0 %v1017
        %v1194 = vpop.f32.mrf.mxu0
        %v1195 = vadd.f32 0.0, %v1194
        %v1196 = vpop.f32.mrf.mxu0
        %1197 = vmatprep.mubr.f32.mxu0 0.0
        %1198 = vmatmul.mubr.f32.gmra.mxu0 %v1020
        %v1199 = vpop.f32.mrf.mxu0
        %v1200 = vadd.f32 0.0, %v1199
        %v1201 = vpop.f32.mrf.mxu0
        %1202 = vmatprep.mubr.f32.mxu0 0.0
        %1203 = vmatmul.mubr.f32.gmra.mxu0 %v1023
        %v1204 = vpop.f32.mrf.mxu0
        %v1205 = vadd.f32 0.0, %v1204
        %v1206 = vpop.f32.mrf.mxu0
        %1207 = vmatprep.mubr.f32.mxu0 0.0
        %1208 = vmatmul.mubr.f32.gmra.mxu0 %v1026
        %v1209 = vpop.f32.mrf.mxu0
        %v1210 = vadd.f32 0.0, %v1209
        %v1211 = vpop.f32.mrf.mxu0
        %1212 = vmatprep.mubr.f32.mxu0 0.0
        %1213 = vmatmul.mubr.f32.gmra.mxu0 %v1029
        %v1214 = vpop.f32.mrf.mxu0
        %v1215 = vadd.f32 0.0, %v1214
        %v1216 = vpop.f32.mrf.mxu0
        %1217 = vmatprep.mubr.f32.mxu0 0.0
        %1218 = vmatmul.mubr.f32.gmra.mxu0 %v1032
        %v1219 = vpop.f32.mrf.mxu0
        %v1220 = vadd.f32 0.0, %v1219
        %v1221 = vpop.f32.mrf.mxu0
        %1222 = vmatprep.mubr.f32.mxu0 0.0
        %1223 = vmatmul.mubr.f32.gmra.mxu0 %v1035
        %v1224 = vpop.f32.mrf.mxu0
        %v1225 = vadd.f32 0.0, %v1224
        %v1226 = vpop.f32.mrf.mxu0
        %1227 = vmatprep.mubr.f32.mxu0 0.0
        %1228 = vmatmul.mubr.f32.gmra.mxu0 %v1038
        %v1229 = vpop.f32.mrf.mxu0
        %v1230 = vadd.f32 0.0, %v1229
        %v1231 = vpop.f32.mrf.mxu0
        %1232 = vmatprep.mubr.f32.mxu0 0.0
        %1233 = vmatmul.mubr.f32.gmra.mxu0 %v1041
        %v1234 = vpop.f32.mrf.mxu0
        %v1235 = vadd.f32 0.0, %v1234
        %v1236 = vpop.f32.mrf.mxu0
        %1237 = vmatprep.mubr.f32.mxu0 0.0
        %1238 = vmatmul.mubr.f32.gmra.mxu0 %v1044
        %v1239 = vpop.f32.mrf.mxu0
        %v1240 = vadd.f32 0.0, %v1239
        %v1241 = vpop.f32.mrf.mxu0
        %1242 = vmatprep.mubr.f32.mxu0 0.0
        %1243 = vmatmul.mubr.f32.gmra.mxu0 %v1047
        %v1244 = vpop.f32.mrf.mxu0
        %v1245 = vadd.f32 0.0, %v1244
        %v1246 = vpop.f32.mrf.mxu0
        %1247 = vmatprep.mubr.f32.mxu0 0.0
        %1248 = vmatmul.mubr.f32.gmra.mxu0 %v1050
        %v1249 = vpop.f32.mrf.mxu0
        %v1250 = vadd.f32 0.0, %v1249
        %v1251 = vpop.f32.mrf.mxu0
        %1252 = vmatprep.mubr.f32.mxu0 0.0
        %1253 = vmatmul.mubr.f32.gmra.mxu0 %v1053
        %v1254 = vpop.f32.mrf.mxu0
        %v1255 = vadd.f32 0.0, %v1254
        %v1256 = vpop.f32.mrf.mxu0
        %1257 = vmatprep.mubr.f32.mxu0 0.0
        %1258 = vmatmul.mubr.f32.gmra.mxu0 %v1056
        %v1259 = vpop.f32.mrf.mxu0
        %v1260 = vadd.f32 0.0, %v1259
        %v1261 = vpop.f32.mrf.mxu0
        %1262 = vmatprep.mubr.f32.mxu0 0.0
        %1263 = vmatmul.mubr.f32.gmra.mxu0 %v1059
        %v1264 = vpop.f32.mrf.mxu0
        %v1265 = vadd.f32 0.0, %v1264
        %v1266 = vpop.f32.mrf.mxu0
        %1267 = vmatprep.mubr.f32.mxu0 0.0
        %1268 = vmatmul.mubr.f32.gmra.mxu0 %v1062
        %v1269 = vpop.f32.mrf.mxu0
        %v1270 = vadd.f32 0.0, %v1269
        %v1271 = vpop.f32.mrf.mxu0
        %1272 = vmatprep.mubr.f32.mxu0 0.0
        %1273 = vmatmul.mubr.f32.gmra.mxu0 %v1065
        %v1274 = vpop.f32.mrf.mxu0
        %v1275 = vadd.f32 0.0, %v1274
        %v1276 = vpop.f32.mrf.mxu0
        %1277 = vmatprep.mubr.f32.mxu0 0.0
        %1278 = vmatmul.mubr.f32.gmra.mxu0 %v1068
        %v1279 = vpop.f32.mrf.mxu0
        %v1280 = vadd.f32 0.0, %v1279
        %v1281 = vpop.f32.mrf.mxu0
        %1282 = vmatprep.mubr.f32.mxu0 0.0
        %1283 = vmatmul.mubr.f32.gmra.mxu0 %v1071
        %v1284 = vpop.f32.mrf.mxu0
        %v1285 = vadd.f32 0.0, %v1284
        %v1286 = vpop.f32.mrf.mxu0
        %1287 = vmatprep.mubr.f32.mxu0 0.0
        %1288 = vmatmul.mubr.f32.gmra.mxu0 %v1074
        %v1289 = vpop.f32.mrf.mxu0
        %v1290 = vadd.f32 0.0, %v1289
        %v1291 = vpop.f32.mrf.mxu0
        %1292 = vmatprep.mubr.f32.mxu0 0.0
        %1293 = vmatmul.mubr.f32.gmra.mxu0 %v1077
        %v1294 = vpop.f32.mrf.mxu0
        %v1295 = vadd.f32 0.0, %v1294
        %v1296 = vpop.f32.mrf.mxu0
        %1297 = vmatprep.mubr.f32.mxu0 0.0
        %1298 = vmatmul.mubr.f32.gmra.mxu0 %v1080
        %v1299 = vpop.f32.mrf.mxu0
        %v1300 = vadd.f32 0.0, %v1299
        %v1301 = vpop.f32.mrf.mxu0
        %1302 = vmatprep.mubr.f32.mxu0 0.0
        %1303 = vmatmul.mubr.f32.gmra.mxu0 %v1083
        %v1304 = vpop.f32.mrf.mxu0
        %v1305 = vadd.f32 0.0, %v1304
        %v1306 = vpop.f32.mrf.mxu0
        %1307 = vmatprep.mubr.f32.mxu0 0.0
        %1308 = vmatmul.mubr.f32.gmra.mxu0 %v1086
        %v1309 = vpop.f32.mrf.mxu0
        %v1310 = vadd.f32 0.0, %v1309
        %v1311 = vpop.f32.mrf.mxu0
        %1312 = vmatprep.mubr.f32.mxu0 0.0
        %1313 = vmatmul.mubr.f32.gmra.mxu0 %v1089
        %v1314 = vpop.f32.mrf.mxu0
        %v1315 = vadd.f32 0.0, %v1314
        %v1316 = vpop.f32.mrf.mxu0
        %1317 = vmatprep.mubr.f32.mxu0 0.0
        %1318 = vmatmul.mubr.f32.gmra.mxu0 %v1092
        %v1319 = vpop.f32.mrf.mxu0
        %v1320 = vadd.f32 0.0, %v1319
        %v1321 = vpop.f32.mrf.mxu0
        %1322 = vmatprep.mubr.f32.mxu0 0.0
        %1323 = vmatmul.mubr.f32.gmra.mxu0 %v1095
        %v1324 = vpop.f32.mrf.mxu0
        %v1325 = vadd.f32 0.0, %v1324
        %v1326 = vpop.f32.mrf.mxu0
        %1327 = vmatprep.mubr.f32.mxu0 0.0
        %1328 = vmatmul.mubr.f32.gmra.mxu0 %v1098
        %v1329 = vpop.f32.mrf.mxu0
        %v1330 = vadd.f32 0.0, %v1329
        %v1331 = vpop.f32.mrf.mxu0
        %1332 = vmatprep.mubr.f32.mxu0 0.0
        %1333 = vmatmul.mubr.f32.gmra.mxu0 %v1101
        %v1334 = vpop.f32.mrf.mxu0
        %v1335 = vadd.f32 0.0, %v1334
        %v1336 = vpop.f32.mrf.mxu0
        %1337 = vmatprep.mubr.f32.mxu0 0.0
        %1338 = vmatmul.mubr.f32.gmra.mxu0 %v1104
        %v1339 = vpop.f32.mrf.mxu0
        %v1340 = vadd.f32 0.0, %v1339
        %v1341 = vpop.f32.mrf.mxu0
        %1342 = vmatprep.mubr.f32.mxu0 0.0
        %1343 = vmatmul.mubr.f32.gmra.mxu0 %v1107
        %v1344 = vpop.f32.mrf.mxu0
        %v1345 = vadd.f32 0.0, %v1344
        %v1346 = vpop.f32.mrf.mxu0
        %1347 = vmatprep.mubr.f32.mxu0 0.0
        %1348 = vmatmul.mubr.f32.gmra.mxu0 %v1110
        %v1349 = vpop.f32.mrf.mxu0
        %v1350 = vadd.f32 0.0, %v1349
        %v1351 = vpop.f32.mrf.mxu0
        %1352 = vmatprep.mubr.f32.mxu0 0.0
        %1353 = vmatmul.mubr.f32.gmra.mxu0 %v1113
        %v1354 = vpop.f32.mrf.mxu0
        %v1355 = vadd.f32 0.0, %v1354
        %v1356 = vpop.f32.mrf.mxu0
        %1357 = vmatprep.mubr.f32.mxu0 0.0
        %1358 = vmatmul.mubr.f32.gmra.mxu0 %v1116
        %v1359 = vpop.f32.mrf.mxu0
        %v1360 = vadd.f32 0.0, %v1359
        %v1361 = vpop.f32.mrf.mxu0
        %1362 = vdwg.mxu0
        %v1363 = vadd.f32 %v792, %v1185
        %v1364 = vadd.f32 %v797, %v1190
        %v1365 = vadd.f32 %v802, %v1195
        %v1366 = vadd.f32 %v807, %v1200
        %v1367 = vadd.f32 %v812, %v1205
        %v1368 = vadd.f32 %v817, %v1210
        %v1369 = vadd.f32 %v822, %v1215
        %v1370 = vadd.f32 %v827, %v1220
        %v1371 = vadd.f32 %v832, %v1225
        %v1372 = vadd.f32 %v837, %v1230
        %v1373 = vadd.f32 %v842, %v1235
        %v1374 = vadd.f32 %v847, %v1240
        %v1375 = vadd.f32 %v852, %v1245
        %v1376 = vadd.f32 %v857, %v1250
        %v1377 = vadd.f32 %v862, %v1255
        %v1378 = vadd.f32 %v867, %v1260
        %v1379 = vadd.f32 %v872, %v1265
        %v1380 = vadd.f32 %v877, %v1270
        %v1381 = vadd.f32 %v882, %v1275
        %v1382 = vadd.f32 %v887, %v1280
        %v1383 = vadd.f32 %v892, %v1285
        %v1384 = vadd.f32 %v897, %v1290
        %v1385 = vadd.f32 %v902, %v1295
        %v1386 = vadd.f32 %v907, %v1300
        %v1387 = vadd.f32 %v912, %v1305
        %v1388 = vadd.f32 %v917, %v1310
        %v1389 = vadd.f32 %v922, %v1315
        %v1390 = vadd.f32 %v927, %v1320
        %v1391 = vadd.f32 %v932, %v1325
        %v1392 = vadd.f32 %v937, %v1330
        %v1393 = vadd.f32 %v942, %v1335
        %v1394 = vadd.f32 %v947, %v1340
        %v1395 = vadd.f32 %v952, %v1345
        %v1396 = vadd.f32 %v957, %v1350
        %v1397 = vadd.f32 %v962, %v1355
        %v1398 = vadd.f32 %v967, %v1360
        %s1399 = sadd.s32 %s184, 19
        %s1400 = scalar_lea.vmem %s182, %s1399
        %v1401 = vld [vmem:[%s1400] sm:$0xff]
        %v1402 = vld [vmem:[%s1400 + $0x8] sm:$0xff]
        %v1403 = vld [vmem:[%s1400 + $0x10] sm:$0xff]
        %v1404 = vld [vmem:[%s1400 + $0x18] sm:$0xff]
        %v1405 = vld [vmem:[%s1400 + $0x20] sm:$0xff]
        %v1406 = vld [vmem:[%s1400 + $0x28] sm:$0xff]
        %v1407 = vld [vmem:[%s1400 + $0x30] sm:$0xff]
        %v1408 = vld [vmem:[%s1400 + $0x38] sm:$0xff]
        %v1409 = vld [vmem:[%s1400 + $0x40] sm:$0xff]
        %v1410 = vld [vmem:[%s1400 + $0x48] sm:$0xff]
        %v1411 = vld [vmem:[%s1400 + $0x50] sm:$0xff]
        %v1412 = vld [vmem:[%s1400 + $0x58] sm:$0xff]
        %v1413 = vld [vmem:[%s1400 + $0x60] sm:$0xff]
        %v1414 = vld [vmem:[%s1400 + $0x68] sm:$0xff]
        %v1415 = vld [vmem:[%s1400 + $0x70] sm:$0xff]
        %v1416 = vld [vmem:[%s1400 + $0x78] sm:$0xff]
        %v1417 = vld [vmem:[%s1400 + $0x80] sm:$0xff]
        %v1418 = vld [vmem:[%s1400 + $0x88] sm:$0xff]
        %v1419 = vld [vmem:[%s1400 + $0x90] sm:$0xff]
        %v1420 = vld [vmem:[%s1400 + $0x98] sm:$0xff]
        %v1421 = vld [vmem:[%s1400 + $0xa0] sm:$0xff]
        %v1422 = vld [vmem:[%s1400 + $0xa8] sm:$0xff]
        %v1423 = vld [vmem:[%s1400 + $0xb0] sm:$0xff]
        %v1424 = vld [vmem:[%s1400 + $0xb8] sm:$0xff]
        %v1425 = vld [vmem:[%s1400 + $0xc0] sm:$0xff]
        %v1426 = vld [vmem:[%s1400 + $0xc8] sm:$0xff]
        %v1427 = vld [vmem:[%s1400 + $0xd0] sm:$0xff]
        %v1428 = vld [vmem:[%s1400 + $0xd8] sm:$0xff]
        %v1429 = vld [vmem:[%s1400 + $0xe0] sm:$0xff]
        %v1430 = vld [vmem:[%s1400 + $0xe8] sm:$0xff]
        %v1431 = vld [vmem:[%s1400 + $0xf0] sm:$0xff]
        %v1432 = vld [vmem:[%s1400 + $0xf8] sm:$0xff]
        %v1433 = vld [vmem:[%s1400 + $0x100] sm:$0xff]
        %v1434 = vld [vmem:[%s1400 + $0x108] sm:$0xff]
        %v1435 = vld [vmem:[%s1400 + $0x110] sm:$0xff]
        %v1436 = vld [vmem:[%s1400 + $0x118] sm:$0xff]
        %s1437 = scalar_lea.vmem %s1, 24
        %v1438 = vld [vmem:[%s1437] sm:$0xff]
        %v1440 = vsel %vm263, %v1401, 0
        %v1443 = vsel %vm263, %v1402, 0
        %v1446 = vsel %vm263, %v1403, 0
        %v1449 = vsel %vm263, %v1404, 0
        %v1452 = vsel %vm263, %v1405, 0
        %v1455 = vsel %vm263, %v1406, 0
        %v1458 = vsel %vm263, %v1407, 0
        %v1461 = vsel %vm263, %v1408, 0
        %v1464 = vsel %vm263, %v1409, 0
        %v1467 = vsel %vm263, %v1410, 0
        %v1470 = vsel %vm263, %v1411, 0
        %v1473 = vsel %vm263, %v1412, 0
        %v1476 = vsel %vm263, %v1413, 0
        %v1479 = vsel %vm263, %v1414, 0
        %v1482 = vsel %vm263, %v1415, 0
        %v1485 = vsel %vm263, %v1416, 0
        %v1488 = vsel %vm263, %v1417, 0
        %v1491 = vsel %vm263, %v1418, 0
        %v1494 = vsel %vm263, %v1419, 0
        %v1497 = vsel %vm263, %v1420, 0
        %v1500 = vsel %vm263, %v1421, 0
        %v1503 = vsel %vm263, %v1422, 0
        %v1506 = vsel %vm263, %v1423, 0
        %v1509 = vsel %vm263, %v1424, 0
        %v1512 = vsel %vm263, %v1425, 0
        %v1515 = vsel %vm263, %v1426, 0
        %v1518 = vsel %vm263, %v1427, 0
        %v1521 = vsel %vm263, %v1428, 0
        %v1524 = vsel %vm263, %v1429, 0
        %v1527 = vsel %vm263, %v1430, 0
        %v1530 = vsel %vm263, %v1431, 0
        %v1533 = vsel %vm263, %v1432, 0
        %v1536 = vsel %vm263, %v1433, 0
        %v1539 = vsel %vm263, %v1434, 0
        %v1542 = vsel %vm263, %v1435, 0
        %v1545 = vsel %vm263, %v1436, 0
        %1547 = vmatprep.subr.mxu0 0.0
        %1548 = vmatpush1.msra.mxu0 0.0
        %1549 = vmatprep.subr.mxu0 0.0
        %1550 = vmatpush1.msra.mxu0 0.0
        %1551 = vmatprep.subr.mxu0 0.0
        %1552 = vmatpush1.msra.mxu0 0.0
        %1553 = vmatprep.subr.mxu0 0.0
        %1554 = vmatpush1.msra.mxu0 0.0
        %1555 = vmatprep.subr.mxu0 0.0
        %1556 = vmatpush1.msra.mxu0 0.0
        %1557 = vmatprep.subr.mxu0 0.0
        %1558 = vmatpush1.msra.mxu0 0.0
        %1559 = vmatprep.subr.mxu0 0.0
        %1560 = vmatpush1.msra.mxu0 0.0
        %1561 = vmatprep.subr.mxu0 0.0
        %1562 = vmatpush1.msra.mxu0 0.0
        %1563 = vmatprep.subr.mxu0 0.0
        %1564 = vmatpush1.msra.mxu0 0.0
        %1565 = vmatprep.subr.mxu0 0.0
        %1566 = vmatpush1.msra.mxu0 0.0
        %1567 = vmatprep.subr.mxu0 0.0
        %1568 = vmatpush1.msra.mxu0 0.0
        %1569 = vmatprep.subr.mxu0 0.0
        %1570 = vmatpush1.msra.mxu0 0.0
        %1571 = vmatprep.subr.mxu0 0.0
        %1572 = vmatpush1.msra.mxu0 0.0
        %1573 = vmatprep.subr.mxu0 0.0
        %1574 = vmatpush1.msra.mxu0 0.0
        %1575 = vmatprep.subr.mxu0 0.0
        %1576 = vmatpush1.msra.mxu0 0.0
        %1577 = vmatprep.subr.mxu0 0.0
        %1578 = vmatpush1.msra.mxu0 %v1438
        %1579 = vmatprep.subr.mxu0 0.0
        %1580 = vmatpush2.msra.mxu0 0.0
        %1581 = vmatprep.subr.mxu0 0.0
        %1582 = vmatpush2.msra.mxu0 0.0
        %1583 = vmatprep.subr.mxu0 0.0
        %1584 = vmatpush2.msra.mxu0 0.0
        %1585 = vmatprep.subr.mxu0 0.0
        %1586 = vmatpush2.msra.mxu0 0.0
        %1587 = vmatprep.subr.mxu0 0.0
        %1588 = vmatpush2.msra.mxu0 0.0
        %1589 = vmatprep.subr.mxu0 0.0
        %1590 = vmatpush2.msra.mxu0 0.0
        %1591 = vmatprep.subr.mxu0 0.0
        %1592 = vmatpush2.msra.mxu0 0.0
        %1593 = vmatprep.subr.mxu0 0.0
        %1594 = vmatpush2.msra.mxu0 0.0
        %1595 = vmatprep.subr.mxu0 0.0
        %1596 = vmatpush2.msra.mxu0 0.0
        %1597 = vmatprep.subr.mxu0 0.0
        %1598 = vmatpush2.msra.mxu0 0.0
        %1599 = vmatprep.subr.mxu0 0.0
        %1600 = vmatpush2.msra.mxu0 0.0
        %1601 = vmatprep.subr.mxu0 0.0
        %1602 = vmatpush2.msra.mxu0 0.0
        %1603 = vmatprep.subr.mxu0 0.0
        %1604 = vmatpush2.msra.mxu0 0.0
        %1605 = vmatprep.subr.mxu0 0.0
        %1606 = vmatpush2.msra.mxu0 0.0
        %1607 = vmatprep.subr.mxu0 0.0
        %1608 = vmatpush2.msra.mxu0 0.0
        %1609 = vmatprep.subr.mxu0 0.0
        %1610 = vmatpush2.msra.mxu0 0.0
        %1611 = vmatprep.mubr.f32.mxu0 0.0
        %1612 = vmatmul.mubr.f32.gmra.mxu0 %v1440
        %v1613 = vpop.f32.mrf.mxu0
        %v1614 = vadd.f32 0.0, %v1613
        %v1615 = vpop.f32.mrf.mxu0
        %1616 = vmatprep.mubr.f32.mxu0 0.0
        %1617 = vmatmul.mubr.f32.gmra.mxu0 %v1443
        %v1618 = vpop.f32.mrf.mxu0
        %v1619 = vadd.f32 0.0, %v1618
        %v1620 = vpop.f32.mrf.mxu0
        %1621 = vmatprep.mubr.f32.mxu0 0.0
        %1622 = vmatmul.mubr.f32.gmra.mxu0 %v1446
        %v1623 = vpop.f32.mrf.mxu0
        %v1624 = vadd.f32 0.0, %v1623
        %v1625 = vpop.f32.mrf.mxu0
        %1626 = vmatprep.mubr.f32.mxu0 0.0
        %1627 = vmatmul.mubr.f32.gmra.mxu0 %v1449
        %v1628 = vpop.f32.mrf.mxu0
        %v1629 = vadd.f32 0.0, %v1628
        %v1630 = vpop.f32.mrf.mxu0
        %1631 = vmatprep.mubr.f32.mxu0 0.0
        %1632 = vmatmul.mubr.f32.gmra.mxu0 %v1452
        %v1633 = vpop.f32.mrf.mxu0
        %v1634 = vadd.f32 0.0, %v1633
        %v1635 = vpop.f32.mrf.mxu0
        %1636 = vmatprep.mubr.f32.mxu0 0.0
        %1637 = vmatmul.mubr.f32.gmra.mxu0 %v1455
        %v1638 = vpop.f32.mrf.mxu0
        %v1639 = vadd.f32 0.0, %v1638
        %v1640 = vpop.f32.mrf.mxu0
        %1641 = vmatprep.mubr.f32.mxu0 0.0
        %1642 = vmatmul.mubr.f32.gmra.mxu0 %v1458
        %v1643 = vpop.f32.mrf.mxu0
        %v1644 = vadd.f32 0.0, %v1643
        %v1645 = vpop.f32.mrf.mxu0
        %1646 = vmatprep.mubr.f32.mxu0 0.0
        %1647 = vmatmul.mubr.f32.gmra.mxu0 %v1461
        %v1648 = vpop.f32.mrf.mxu0
        %v1649 = vadd.f32 0.0, %v1648
        %v1650 = vpop.f32.mrf.mxu0
        %1651 = vmatprep.mubr.f32.mxu0 0.0
        %1652 = vmatmul.mubr.f32.gmra.mxu0 %v1464
        %v1653 = vpop.f32.mrf.mxu0
        %v1654 = vadd.f32 0.0, %v1653
        %v1655 = vpop.f32.mrf.mxu0
        %1656 = vmatprep.mubr.f32.mxu0 0.0
        %1657 = vmatmul.mubr.f32.gmra.mxu0 %v1467
        %v1658 = vpop.f32.mrf.mxu0
        %v1659 = vadd.f32 0.0, %v1658
        %v1660 = vpop.f32.mrf.mxu0
        %1661 = vmatprep.mubr.f32.mxu0 0.0
        %1662 = vmatmul.mubr.f32.gmra.mxu0 %v1470
        %v1663 = vpop.f32.mrf.mxu0
        %v1664 = vadd.f32 0.0, %v1663
        %v1665 = vpop.f32.mrf.mxu0
        %1666 = vmatprep.mubr.f32.mxu0 0.0
        %1667 = vmatmul.mubr.f32.gmra.mxu0 %v1473
        %v1668 = vpop.f32.mrf.mxu0
        %v1669 = vadd.f32 0.0, %v1668
        %v1670 = vpop.f32.mrf.mxu0
        %1671 = vmatprep.mubr.f32.mxu0 0.0
        %1672 = vmatmul.mubr.f32.gmra.mxu0 %v1476
        %v1673 = vpop.f32.mrf.mxu0
        %v1674 = vadd.f32 0.0, %v1673
        %v1675 = vpop.f32.mrf.mxu0
        %1676 = vmatprep.mubr.f32.mxu0 0.0
        %1677 = vmatmul.mubr.f32.gmra.mxu0 %v1479
        %v1678 = vpop.f32.mrf.mxu0
        %v1679 = vadd.f32 0.0, %v1678
        %v1680 = vpop.f32.mrf.mxu0
        %1681 = vmatprep.mubr.f32.mxu0 0.0
        %1682 = vmatmul.mubr.f32.gmra.mxu0 %v1482
        %v1683 = vpop.f32.mrf.mxu0
        %v1684 = vadd.f32 0.0, %v1683
        %v1685 = vpop.f32.mrf.mxu0
        %1686 = vmatprep.mubr.f32.mxu0 0.0
        %1687 = vmatmul.mubr.f32.gmra.mxu0 %v1485
        %v1688 = vpop.f32.mrf.mxu0
        %v1689 = vadd.f32 0.0, %v1688
        %v1690 = vpop.f32.mrf.mxu0
        %1691 = vmatprep.mubr.f32.mxu0 0.0
        %1692 = vmatmul.mubr.f32.gmra.mxu0 %v1488
        %v1693 = vpop.f32.mrf.mxu0
        %v1694 = vadd.f32 0.0, %v1693
        %v1695 = vpop.f32.mrf.mxu0
        %1696 = vmatprep.mubr.f32.mxu0 0.0
        %1697 = vmatmul.mubr.f32.gmra.mxu0 %v1491
        %v1698 = vpop.f32.mrf.mxu0
        %v1699 = vadd.f32 0.0, %v1698
        %v1700 = vpop.f32.mrf.mxu0
        %1701 = vmatprep.mubr.f32.mxu0 0.0
        %1702 = vmatmul.mubr.f32.gmra.mxu0 %v1494
        %v1703 = vpop.f32.mrf.mxu0
        %v1704 = vadd.f32 0.0, %v1703
        %v1705 = vpop.f32.mrf.mxu0
        %1706 = vmatprep.mubr.f32.mxu0 0.0
        %1707 = vmatmul.mubr.f32.gmra.mxu0 %v1497
        %v1708 = vpop.f32.mrf.mxu0
        %v1709 = vadd.f32 0.0, %v1708
        %v1710 = vpop.f32.mrf.mxu0
        %1711 = vmatprep.mubr.f32.mxu0 0.0
        %1712 = vmatmul.mubr.f32.gmra.mxu0 %v1500
        %v1713 = vpop.f32.mrf.mxu0
        %v1714 = vadd.f32 0.0, %v1713
        %v1715 = vpop.f32.mrf.mxu0
        %1716 = vmatprep.mubr.f32.mxu0 0.0
        %1717 = vmatmul.mubr.f32.gmra.mxu0 %v1503
        %v1718 = vpop.f32.mrf.mxu0
        %v1719 = vadd.f32 0.0, %v1718
        %v1720 = vpop.f32.mrf.mxu0
        %1721 = vmatprep.mubr.f32.mxu0 0.0
        %1722 = vmatmul.mubr.f32.gmra.mxu0 %v1506
        %v1723 = vpop.f32.mrf.mxu0
        %v1724 = vadd.f32 0.0, %v1723
        %v1725 = vpop.f32.mrf.mxu0
        %1726 = vmatprep.mubr.f32.mxu0 0.0
        %1727 = vmatmul.mubr.f32.gmra.mxu0 %v1509
        %v1728 = vpop.f32.mrf.mxu0
        %v1729 = vadd.f32 0.0, %v1728
        %v1730 = vpop.f32.mrf.mxu0
        %1731 = vmatprep.mubr.f32.mxu0 0.0
        %1732 = vmatmul.mubr.f32.gmra.mxu0 %v1512
        %v1733 = vpop.f32.mrf.mxu0
        %v1734 = vadd.f32 0.0, %v1733
        %v1735 = vpop.f32.mrf.mxu0
        %1736 = vmatprep.mubr.f32.mxu0 0.0
        %1737 = vmatmul.mubr.f32.gmra.mxu0 %v1515
        %v1738 = vpop.f32.mrf.mxu0
        %v1739 = vadd.f32 0.0, %v1738
        %v1740 = vpop.f32.mrf.mxu0
        %1741 = vmatprep.mubr.f32.mxu0 0.0
        %1742 = vmatmul.mubr.f32.gmra.mxu0 %v1518
        %v1743 = vpop.f32.mrf.mxu0
        %v1744 = vadd.f32 0.0, %v1743
        %v1745 = vpop.f32.mrf.mxu0
        %1746 = vmatprep.mubr.f32.mxu0 0.0
        %1747 = vmatmul.mubr.f32.gmra.mxu0 %v1521
        %v1748 = vpop.f32.mrf.mxu0
        %v1749 = vadd.f32 0.0, %v1748
        %v1750 = vpop.f32.mrf.mxu0
        %1751 = vmatprep.mubr.f32.mxu0 0.0
        %1752 = vmatmul.mubr.f32.gmra.mxu0 %v1524
        %v1753 = vpop.f32.mrf.mxu0
        %v1754 = vadd.f32 0.0, %v1753
        %v1755 = vpop.f32.mrf.mxu0
        %1756 = vmatprep.mubr.f32.mxu0 0.0
        %1757 = vmatmul.mubr.f32.gmra.mxu0 %v1527
        %v1758 = vpop.f32.mrf.mxu0
        %v1759 = vadd.f32 0.0, %v1758
        %v1760 = vpop.f32.mrf.mxu0
        %1761 = vmatprep.mubr.f32.mxu0 0.0
        %1762 = vmatmul.mubr.f32.gmra.mxu0 %v1530
        %v1763 = vpop.f32.mrf.mxu0
        %v1764 = vadd.f32 0.0, %v1763
        %v1765 = vpop.f32.mrf.mxu0
        %1766 = vmatprep.mubr.f32.mxu0 0.0
        %1767 = vmatmul.mubr.f32.gmra.mxu0 %v1533
        %v1768 = vpop.f32.mrf.mxu0
        %v1769 = vadd.f32 0.0, %v1768
        %v1770 = vpop.f32.mrf.mxu0
        %1771 = vmatprep.mubr.f32.mxu0 0.0
        %1772 = vmatmul.mubr.f32.gmra.mxu0 %v1536
        %v1773 = vpop.f32.mrf.mxu0
        %v1774 = vadd.f32 0.0, %v1773
        %v1775 = vpop.f32.mrf.mxu0
        %1776 = vmatprep.mubr.f32.mxu0 0.0
        %1777 = vmatmul.mubr.f32.gmra.mxu0 %v1539
        %v1778 = vpop.f32.mrf.mxu0
        %v1779 = vadd.f32 0.0, %v1778
        %v1780 = vpop.f32.mrf.mxu0
        %1781 = vmatprep.mubr.f32.mxu0 0.0
        %1782 = vmatmul.mubr.f32.gmra.mxu0 %v1542
        %v1783 = vpop.f32.mrf.mxu0
        %v1784 = vadd.f32 0.0, %v1783
        %v1785 = vpop.f32.mrf.mxu0
        %1786 = vmatprep.mubr.f32.mxu0 0.0
        %1787 = vmatmul.mubr.f32.gmra.mxu0 %v1545
        %v1788 = vpop.f32.mrf.mxu0
        %v1789 = vadd.f32 0.0, %v1788
        %v1790 = vpop.f32.mrf.mxu0
        %1791 = vdwg.mxu0
        %v1792 = vadd.f32 %v1363, %v1614
        %v1793 = vadd.f32 %v1364, %v1619
        %v1794 = vadd.f32 %v1365, %v1624
        %v1795 = vadd.f32 %v1366, %v1629
        %v1796 = vadd.f32 %v1367, %v1634
        %v1797 = vadd.f32 %v1368, %v1639
        %v1798 = vadd.f32 %v1369, %v1644
        %v1799 = vadd.f32 %v1370, %v1649
        %v1800 = vadd.f32 %v1371, %v1654
        %v1801 = vadd.f32 %v1372, %v1659
        %v1802 = vadd.f32 %v1373, %v1664
        %v1803 = vadd.f32 %v1374, %v1669
        %v1804 = vadd.f32 %v1375, %v1674
        %v1805 = vadd.f32 %v1376, %v1679
        %v1806 = vadd.f32 %v1377, %v1684
        %v1807 = vadd.f32 %v1378, %v1689
        %v1808 = vadd.f32 %v1379, %v1694
        %v1809 = vadd.f32 %v1380, %v1699
        %v1810 = vadd.f32 %v1381, %v1704
        %v1811 = vadd.f32 %v1382, %v1709
        %v1812 = vadd.f32 %v1383, %v1714
        %v1813 = vadd.f32 %v1384, %v1719
        %v1814 = vadd.f32 %v1385, %v1724
        %v1815 = vadd.f32 %v1386, %v1729
        %v1816 = vadd.f32 %v1387, %v1734
        %v1817 = vadd.f32 %v1388, %v1739
        %v1818 = vadd.f32 %v1389, %v1744
        %v1819 = vadd.f32 %v1390, %v1749
        %v1820 = vadd.f32 %v1391, %v1754
        %v1821 = vadd.f32 %v1392, %v1759
        %v1822 = vadd.f32 %v1393, %v1764
        %v1823 = vadd.f32 %v1394, %v1769
        %v1824 = vadd.f32 %v1395, %v1774
        %v1825 = vadd.f32 %v1396, %v1779
        %v1826 = vadd.f32 %v1397, %v1784
        %v1827 = vadd.f32 %v1398, %v1789
        %s1828 = sadd.s32 %s184, 36
        %s1829 = scalar_lea.vmem %s182, %s1828
        %v1830 = vld [vmem:[%s1829] sm:$0xff]
        %v1831 = vld [vmem:[%s1829 + $0x8] sm:$0xff]
        %v1832 = vld [vmem:[%s1829 + $0x10] sm:$0xff]
        %v1833 = vld [vmem:[%s1829 + $0x18] sm:$0xff]
        %v1834 = vld [vmem:[%s1829 + $0x20] sm:$0xff]
        %v1835 = vld [vmem:[%s1829 + $0x28] sm:$0xff]
        %v1836 = vld [vmem:[%s1829 + $0x30] sm:$0xff]
        %v1837 = vld [vmem:[%s1829 + $0x38] sm:$0xff]
        %v1838 = vld [vmem:[%s1829 + $0x40] sm:$0xff]
        %v1839 = vld [vmem:[%s1829 + $0x48] sm:$0xff]
        %v1840 = vld [vmem:[%s1829 + $0x50] sm:$0xff]
        %v1841 = vld [vmem:[%s1829 + $0x58] sm:$0xff]
        %v1842 = vld [vmem:[%s1829 + $0x60] sm:$0xff]
        %v1843 = vld [vmem:[%s1829 + $0x68] sm:$0xff]
        %v1844 = vld [vmem:[%s1829 + $0x70] sm:$0xff]
        %v1845 = vld [vmem:[%s1829 + $0x78] sm:$0xff]
        %v1846 = vld [vmem:[%s1829 + $0x80] sm:$0xff]
        %v1847 = vld [vmem:[%s1829 + $0x88] sm:$0xff]
        %v1848 = vld [vmem:[%s1829 + $0x90] sm:$0xff]
        %v1849 = vld [vmem:[%s1829 + $0x98] sm:$0xff]
        %v1850 = vld [vmem:[%s1829 + $0xa0] sm:$0xff]
        %v1851 = vld [vmem:[%s1829 + $0xa8] sm:$0xff]
        %v1852 = vld [vmem:[%s1829 + $0xb0] sm:$0xff]
        %v1853 = vld [vmem:[%s1829 + $0xb8] sm:$0xff]
        %v1854 = vld [vmem:[%s1829 + $0xc0] sm:$0xff]
        %v1855 = vld [vmem:[%s1829 + $0xc8] sm:$0xff]
        %v1856 = vld [vmem:[%s1829 + $0xd0] sm:$0xff]
        %v1857 = vld [vmem:[%s1829 + $0xd8] sm:$0xff]
        %v1858 = vld [vmem:[%s1829 + $0xe0] sm:$0xff]
        %v1859 = vld [vmem:[%s1829 + $0xe8] sm:$0xff]
        %v1860 = vld [vmem:[%s1829 + $0xf0] sm:$0xff]
        %v1861 = vld [vmem:[%s1829 + $0xf8] sm:$0xff]
        %v1862 = vld [vmem:[%s1829 + $0x100] sm:$0xff]
        %v1863 = vld [vmem:[%s1829 + $0x108] sm:$0xff]
        %v1864 = vld [vmem:[%s1829 + $0x110] sm:$0xff]
        %v1865 = vld [vmem:[%s1829 + $0x118] sm:$0xff]
        %s1866 = scalar_lea.vmem %s1, 32
        %v1867 = vld [vmem:[%s1866] sm:$0xff]
        %v1869 = vsel %vm263, %v1830, 0
        %v1872 = vsel %vm263, %v1831, 0
        %v1875 = vsel %vm263, %v1832, 0
        %v1878 = vsel %vm263, %v1833, 0
        %v1881 = vsel %vm263, %v1834, 0
        %v1884 = vsel %vm263, %v1835, 0
        %v1887 = vsel %vm263, %v1836, 0
        %v1890 = vsel %vm263, %v1837, 0
        %v1893 = vsel %vm263, %v1838, 0
        %v1896 = vsel %vm263, %v1839, 0
        %v1899 = vsel %vm263, %v1840, 0
        %v1902 = vsel %vm263, %v1841, 0
        %v1905 = vsel %vm263, %v1842, 0
        %v1908 = vsel %vm263, %v1843, 0
        %v1911 = vsel %vm263, %v1844, 0
        %v1914 = vsel %vm263, %v1845, 0
        %v1917 = vsel %vm263, %v1846, 0
        %v1920 = vsel %vm263, %v1847, 0
        %v1923 = vsel %vm263, %v1848, 0
        %v1926 = vsel %vm263, %v1849, 0
        %v1929 = vsel %vm263, %v1850, 0
        %v1932 = vsel %vm263, %v1851, 0
        %v1935 = vsel %vm263, %v1852, 0
        %v1938 = vsel %vm263, %v1853, 0
        %v1941 = vsel %vm263, %v1854, 0
        %v1944 = vsel %vm263, %v1855, 0
        %v1947 = vsel %vm263, %v1856, 0
        %v1950 = vsel %vm263, %v1857, 0
        %v1953 = vsel %vm263, %v1858, 0
        %v1956 = vsel %vm263, %v1859, 0
        %v1959 = vsel %vm263, %v1860, 0
        %v1962 = vsel %vm263, %v1861, 0
        %v1965 = vsel %vm263, %v1862, 0
        %v1968 = vsel %vm263, %v1863, 0
        %v1971 = vsel %vm263, %v1864, 0
        %v1974 = vsel %vm263, %v1865, 0
        %1976 = vmatprep.subr.mxu0 0.0
        %1977 = vmatpush1.msra.mxu0 0.0
        %1978 = vmatprep.subr.mxu0 0.0
        %1979 = vmatpush1.msra.mxu0 0.0
        %1980 = vmatprep.subr.mxu0 0.0
        %1981 = vmatpush1.msra.mxu0 0.0
        %1982 = vmatprep.subr.mxu0 0.0
        %1983 = vmatpush1.msra.mxu0 0.0
        %1984 = vmatprep.subr.mxu0 0.0
        %1985 = vmatpush1.msra.mxu0 0.0
        %1986 = vmatprep.subr.mxu0 0.0
        %1987 = vmatpush1.msra.mxu0 0.0
        %1988 = vmatprep.subr.mxu0 0.0
        %1989 = vmatpush1.msra.mxu0 0.0
        %1990 = vmatprep.subr.mxu0 0.0
        %1991 = vmatpush1.msra.mxu0 0.0
        %1992 = vmatprep.subr.mxu0 0.0
        %1993 = vmatpush1.msra.mxu0 0.0
        %1994 = vmatprep.subr.mxu0 0.0
        %1995 = vmatpush1.msra.mxu0 0.0
        %1996 = vmatprep.subr.mxu0 0.0
        %1997 = vmatpush1.msra.mxu0 0.0
        %1998 = vmatprep.subr.mxu0 0.0
        %1999 = vmatpush1.msra.mxu0 0.0
        %2000 = vmatprep.subr.mxu0 0.0
        %2001 = vmatpush1.msra.mxu0 0.0
        %2002 = vmatprep.subr.mxu0 0.0
        %2003 = vmatpush1.msra.mxu0 0.0
        %2004 = vmatprep.subr.mxu0 0.0
        %2005 = vmatpush1.msra.mxu0 0.0
        %2006 = vmatprep.subr.mxu0 0.0
        %2007 = vmatpush1.msra.mxu0 %v1867
        %2008 = vmatprep.subr.mxu0 0.0
        %2009 = vmatpush2.msra.mxu0 0.0
        %2010 = vmatprep.subr.mxu0 0.0
        %2011 = vmatpush2.msra.mxu0 0.0
        %2012 = vmatprep.subr.mxu0 0.0
        %2013 = vmatpush2.msra.mxu0 0.0
        %2014 = vmatprep.subr.mxu0 0.0
        %2015 = vmatpush2.msra.mxu0 0.0
        %2016 = vmatprep.subr.mxu0 0.0
        %2017 = vmatpush2.msra.mxu0 0.0
        %2018 = vmatprep.subr.mxu0 0.0
        %2019 = vmatpush2.msra.mxu0 0.0
        %2020 = vmatprep.subr.mxu0 0.0
        %2021 = vmatpush2.msra.mxu0 0.0
        %2022 = vmatprep.subr.mxu0 0.0
        %2023 = vmatpush2.msra.mxu0 0.0
        %2024 = vmatprep.subr.mxu0 0.0
        %2025 = vmatpush2.msra.mxu0 0.0
        %2026 = vmatprep.subr.mxu0 0.0
        %2027 = vmatpush2.msra.mxu0 0.0
        %2028 = vmatprep.subr.mxu0 0.0
        %2029 = vmatpush2.msra.mxu0 0.0
        %2030 = vmatprep.subr.mxu0 0.0
        %2031 = vmatpush2.msra.mxu0 0.0
        %2032 = vmatprep.subr.mxu0 0.0
        %2033 = vmatpush2.msra.mxu0 0.0
        %2034 = vmatprep.subr.mxu0 0.0
        %2035 = vmatpush2.msra.mxu0 0.0
        %2036 = vmatprep.subr.mxu0 0.0
        %2037 = vmatpush2.msra.mxu0 0.0
        %2038 = vmatprep.subr.mxu0 0.0
        %2039 = vmatpush2.msra.mxu0 0.0
        %2040 = vmatprep.mubr.f32.mxu0 0.0
        %2041 = vmatmul.mubr.f32.gmra.mxu0 %v1869
        %v2042 = vpop.f32.mrf.mxu0
        %v2043 = vadd.f32 0.0, %v2042
        %v2044 = vpop.f32.mrf.mxu0
        %2045 = vmatprep.mubr.f32.mxu0 0.0
        %2046 = vmatmul.mubr.f32.gmra.mxu0 %v1872
        %v2047 = vpop.f32.mrf.mxu0
        %v2048 = vadd.f32 0.0, %v2047
        %v2049 = vpop.f32.mrf.mxu0
        %2050 = vmatprep.mubr.f32.mxu0 0.0
        %2051 = vmatmul.mubr.f32.gmra.mxu0 %v1875
        %v2052 = vpop.f32.mrf.mxu0
        %v2053 = vadd.f32 0.0, %v2052
        %v2054 = vpop.f32.mrf.mxu0
        %2055 = vmatprep.mubr.f32.mxu0 0.0
        %2056 = vmatmul.mubr.f32.gmra.mxu0 %v1878
        %v2057 = vpop.f32.mrf.mxu0
        %v2058 = vadd.f32 0.0, %v2057
        %v2059 = vpop.f32.mrf.mxu0
        %2060 = vmatprep.mubr.f32.mxu0 0.0
        %2061 = vmatmul.mubr.f32.gmra.mxu0 %v1881
        %v2062 = vpop.f32.mrf.mxu0
        %v2063 = vadd.f32 0.0, %v2062
        %v2064 = vpop.f32.mrf.mxu0
        %2065 = vmatprep.mubr.f32.mxu0 0.0
        %2066 = vmatmul.mubr.f32.gmra.mxu0 %v1884
        %v2067 = vpop.f32.mrf.mxu0
        %v2068 = vadd.f32 0.0, %v2067
        %v2069 = vpop.f32.mrf.mxu0
        %2070 = vmatprep.mubr.f32.mxu0 0.0
        %2071 = vmatmul.mubr.f32.gmra.mxu0 %v1887
        %v2072 = vpop.f32.mrf.mxu0
        %v2073 = vadd.f32 0.0, %v2072
        %v2074 = vpop.f32.mrf.mxu0
        %2075 = vmatprep.mubr.f32.mxu0 0.0
        %2076 = vmatmul.mubr.f32.gmra.mxu0 %v1890
        %v2077 = vpop.f32.mrf.mxu0
        %v2078 = vadd.f32 0.0, %v2077
        %v2079 = vpop.f32.mrf.mxu0
        %2080 = vmatprep.mubr.f32.mxu0 0.0
        %2081 = vmatmul.mubr.f32.gmra.mxu0 %v1893
        %v2082 = vpop.f32.mrf.mxu0
        %v2083 = vadd.f32 0.0, %v2082
        %v2084 = vpop.f32.mrf.mxu0
        %2085 = vmatprep.mubr.f32.mxu0 0.0
        %2086 = vmatmul.mubr.f32.gmra.mxu0 %v1896
        %v2087 = vpop.f32.mrf.mxu0
        %v2088 = vadd.f32 0.0, %v2087
        %v2089 = vpop.f32.mrf.mxu0
        %2090 = vmatprep.mubr.f32.mxu0 0.0
        %2091 = vmatmul.mubr.f32.gmra.mxu0 %v1899
        %v2092 = vpop.f32.mrf.mxu0
        %v2093 = vadd.f32 0.0, %v2092
        %v2094 = vpop.f32.mrf.mxu0
        %2095 = vmatprep.mubr.f32.mxu0 0.0
        %2096 = vmatmul.mubr.f32.gmra.mxu0 %v1902
        %v2097 = vpop.f32.mrf.mxu0
        %v2098 = vadd.f32 0.0, %v2097
        %v2099 = vpop.f32.mrf.mxu0
        %2100 = vmatprep.mubr.f32.mxu0 0.0
        %2101 = vmatmul.mubr.f32.gmra.mxu0 %v1905
        %v2102 = vpop.f32.mrf.mxu0
        %v2103 = vadd.f32 0.0, %v2102
        %v2104 = vpop.f32.mrf.mxu0
        %2105 = vmatprep.mubr.f32.mxu0 0.0
        %2106 = vmatmul.mubr.f32.gmra.mxu0 %v1908
        %v2107 = vpop.f32.mrf.mxu0
        %v2108 = vadd.f32 0.0, %v2107
        %v2109 = vpop.f32.mrf.mxu0
        %2110 = vmatprep.mubr.f32.mxu0 0.0
        %2111 = vmatmul.mubr.f32.gmra.mxu0 %v1911
        %v2112 = vpop.f32.mrf.mxu0
        %v2113 = vadd.f32 0.0, %v2112
        %v2114 = vpop.f32.mrf.mxu0
        %2115 = vmatprep.mubr.f32.mxu0 0.0
        %2116 = vmatmul.mubr.f32.gmra.mxu0 %v1914
        %v2117 = vpop.f32.mrf.mxu0
        %v2118 = vadd.f32 0.0, %v2117
        %v2119 = vpop.f32.mrf.mxu0
        %2120 = vmatprep.mubr.f32.mxu0 0.0
        %2121 = vmatmul.mubr.f32.gmra.mxu0 %v1917
        %v2122 = vpop.f32.mrf.mxu0
        %v2123 = vadd.f32 0.0, %v2122
        %v2124 = vpop.f32.mrf.mxu0
        %2125 = vmatprep.mubr.f32.mxu0 0.0
        %2126 = vmatmul.mubr.f32.gmra.mxu0 %v1920
        %v2127 = vpop.f32.mrf.mxu0
        %v2128 = vadd.f32 0.0, %v2127
        %v2129 = vpop.f32.mrf.mxu0
        %2130 = vmatprep.mubr.f32.mxu0 0.0
        %2131 = vmatmul.mubr.f32.gmra.mxu0 %v1923
        %v2132 = vpop.f32.mrf.mxu0
        %v2133 = vadd.f32 0.0, %v2132
        %v2134 = vpop.f32.mrf.mxu0
        %2135 = vmatprep.mubr.f32.mxu0 0.0
        %2136 = vmatmul.mubr.f32.gmra.mxu0 %v1926
        %v2137 = vpop.f32.mrf.mxu0
        %v2138 = vadd.f32 0.0, %v2137
        %v2139 = vpop.f32.mrf.mxu0
        %2140 = vmatprep.mubr.f32.mxu0 0.0
        %2141 = vmatmul.mubr.f32.gmra.mxu0 %v1929
        %v2142 = vpop.f32.mrf.mxu0
        %v2143 = vadd.f32 0.0, %v2142
        %v2144 = vpop.f32.mrf.mxu0
        %2145 = vmatprep.mubr.f32.mxu0 0.0
        %2146 = vmatmul.mubr.f32.gmra.mxu0 %v1932
        %v2147 = vpop.f32.mrf.mxu0
        %v2148 = vadd.f32 0.0, %v2147
        %v2149 = vpop.f32.mrf.mxu0
        %2150 = vmatprep.mubr.f32.mxu0 0.0
        %2151 = vmatmul.mubr.f32.gmra.mxu0 %v1935
        %v2152 = vpop.f32.mrf.mxu0
        %v2153 = vadd.f32 0.0, %v2152
        %v2154 = vpop.f32.mrf.mxu0
        %2155 = vmatprep.mubr.f32.mxu0 0.0
        %2156 = vmatmul.mubr.f32.gmra.mxu0 %v1938
        %v2157 = vpop.f32.mrf.mxu0
        %v2158 = vadd.f32 0.0, %v2157
        %v2159 = vpop.f32.mrf.mxu0
        %2160 = vmatprep.mubr.f32.mxu0 0.0
        %2161 = vmatmul.mubr.f32.gmra.mxu0 %v1941
        %v2162 = vpop.f32.mrf.mxu0
        %v2163 = vadd.f32 0.0, %v2162
        %v2164 = vpop.f32.mrf.mxu0
        %2165 = vmatprep.mubr.f32.mxu0 0.0
        %2166 = vmatmul.mubr.f32.gmra.mxu0 %v1944
        %v2167 = vpop.f32.mrf.mxu0
        %v2168 = vadd.f32 0.0, %v2167
        %v2169 = vpop.f32.mrf.mxu0
        %2170 = vmatprep.mubr.f32.mxu0 0.0
        %2171 = vmatmul.mubr.f32.gmra.mxu0 %v1947
        %v2172 = vpop.f32.mrf.mxu0
        %v2173 = vadd.f32 0.0, %v2172
        %v2174 = vpop.f32.mrf.mxu0
        %2175 = vmatprep.mubr.f32.mxu0 0.0
        %2176 = vmatmul.mubr.f32.gmra.mxu0 %v1950
        %v2177 = vpop.f32.mrf.mxu0
        %v2178 = vadd.f32 0.0, %v2177
        %v2179 = vpop.f32.mrf.mxu0
        %2180 = vmatprep.mubr.f32.mxu0 0.0
        %2181 = vmatmul.mubr.f32.gmra.mxu0 %v1953
        %v2182 = vpop.f32.mrf.mxu0
        %v2183 = vadd.f32 0.0, %v2182
        %v2184 = vpop.f32.mrf.mxu0
        %2185 = vmatprep.mubr.f32.mxu0 0.0
        %2186 = vmatmul.mubr.f32.gmra.mxu0 %v1956
        %v2187 = vpop.f32.mrf.mxu0
        %v2188 = vadd.f32 0.0, %v2187
        %v2189 = vpop.f32.mrf.mxu0
        %2190 = vmatprep.mubr.f32.mxu0 0.0
        %2191 = vmatmul.mubr.f32.gmra.mxu0 %v1959
        %v2192 = vpop.f32.mrf.mxu0
        %v2193 = vadd.f32 0.0, %v2192
        %v2194 = vpop.f32.mrf.mxu0
        %2195 = vmatprep.mubr.f32.mxu0 0.0
        %2196 = vmatmul.mubr.f32.gmra.mxu0 %v1962
        %v2197 = vpop.f32.mrf.mxu0
        %v2198 = vadd.f32 0.0, %v2197
        %v2199 = vpop.f32.mrf.mxu0
        %2200 = vmatprep.mubr.f32.mxu0 0.0
        %2201 = vmatmul.mubr.f32.gmra.mxu0 %v1965
        %v2202 = vpop.f32.mrf.mxu0
        %v2203 = vadd.f32 0.0, %v2202
        %v2204 = vpop.f32.mrf.mxu0
        %2205 = vmatprep.mubr.f32.mxu0 0.0
        %2206 = vmatmul.mubr.f32.gmra.mxu0 %v1968
        %v2207 = vpop.f32.mrf.mxu0
        %v2208 = vadd.f32 0.0, %v2207
        %v2209 = vpop.f32.mrf.mxu0
        %2210 = vmatprep.mubr.f32.mxu0 0.0
        %2211 = vmatmul.mubr.f32.gmra.mxu0 %v1971
        %v2212 = vpop.f32.mrf.mxu0
        %v2213 = vadd.f32 0.0, %v2212
        %v2214 = vpop.f32.mrf.mxu0
        %2215 = vmatprep.mubr.f32.mxu0 0.0
        %2216 = vmatmul.mubr.f32.gmra.mxu0 %v1974
        %v2217 = vpop.f32.mrf.mxu0
        %v2218 = vadd.f32 0.0, %v2217
        %v2219 = vpop.f32.mrf.mxu0
        %2220 = vdwg.mxu0
        %v2221 = vadd.f32 %v1792, %v2043
        %v2222 = vadd.f32 %v1793, %v2048
        %v2223 = vadd.f32 %v1794, %v2053
        %v2224 = vadd.f32 %v1795, %v2058
        %v2225 = vadd.f32 %v1796, %v2063
        %v2226 = vadd.f32 %v1797, %v2068
        %v2227 = vadd.f32 %v1798, %v2073
        %v2228 = vadd.f32 %v1799, %v2078
        %v2229 = vadd.f32 %v1800, %v2083
        %v2230 = vadd.f32 %v1801, %v2088
        %v2231 = vadd.f32 %v1802, %v2093
        %v2232 = vadd.f32 %v1803, %v2098
        %v2233 = vadd.f32 %v1804, %v2103
        %v2234 = vadd.f32 %v1805, %v2108
        %v2235 = vadd.f32 %v1806, %v2113
        %v2236 = vadd.f32 %v1807, %v2118
        %v2237 = vadd.f32 %v1808, %v2123
        %v2238 = vadd.f32 %v1809, %v2128
        %v2239 = vadd.f32 %v1810, %v2133
        %v2240 = vadd.f32 %v1811, %v2138
        %v2241 = vadd.f32 %v1812, %v2143
        %v2242 = vadd.f32 %v1813, %v2148
        %v2243 = vadd.f32 %v1814, %v2153
        %v2244 = vadd.f32 %v1815, %v2158
        %v2245 = vadd.f32 %v1816, %v2163
        %v2246 = vadd.f32 %v1817, %v2168
        %v2247 = vadd.f32 %v1818, %v2173
        %v2248 = vadd.f32 %v1819, %v2178
        %v2249 = vadd.f32 %v1820, %v2183
        %v2250 = vadd.f32 %v1821, %v2188
        %v2251 = vadd.f32 %v1822, %v2193
        %v2252 = vadd.f32 %v1823, %v2198
        %v2253 = vadd.f32 %v1824, %v2203
        %v2254 = vadd.f32 %v1825, %v2208
        %v2255 = vadd.f32 %v1826, %v2213
        %v2256 = vadd.f32 %v1827, %v2218
        %s2257 = sadd.s32 %s184, 37
        %s2258 = scalar_lea.vmem %s182, %s2257
        %v2259 = vld [vmem:[%s2258] sm:$0xff]
        %v2260 = vld [vmem:[%s2258 + $0x8] sm:$0xff]
        %v2261 = vld [vmem:[%s2258 + $0x10] sm:$0xff]
        %v2262 = vld [vmem:[%s2258 + $0x18] sm:$0xff]
        %v2263 = vld [vmem:[%s2258 + $0x20] sm:$0xff]
        %v2264 = vld [vmem:[%s2258 + $0x28] sm:$0xff]
        %v2265 = vld [vmem:[%s2258 + $0x30] sm:$0xff]
        %v2266 = vld [vmem:[%s2258 + $0x38] sm:$0xff]
        %v2267 = vld [vmem:[%s2258 + $0x40] sm:$0xff]
        %v2268 = vld [vmem:[%s2258 + $0x48] sm:$0xff]
        %v2269 = vld [vmem:[%s2258 + $0x50] sm:$0xff]
        %v2270 = vld [vmem:[%s2258 + $0x58] sm:$0xff]
        %v2271 = vld [vmem:[%s2258 + $0x60] sm:$0xff]
        %v2272 = vld [vmem:[%s2258 + $0x68] sm:$0xff]
        %v2273 = vld [vmem:[%s2258 + $0x70] sm:$0xff]
        %v2274 = vld [vmem:[%s2258 + $0x78] sm:$0xff]
        %v2275 = vld [vmem:[%s2258 + $0x80] sm:$0xff]
        %v2276 = vld [vmem:[%s2258 + $0x88] sm:$0xff]
        %v2277 = vld [vmem:[%s2258 + $0x90] sm:$0xff]
        %v2278 = vld [vmem:[%s2258 + $0x98] sm:$0xff]
        %v2279 = vld [vmem:[%s2258 + $0xa0] sm:$0xff]
        %v2280 = vld [vmem:[%s2258 + $0xa8] sm:$0xff]
        %v2281 = vld [vmem:[%s2258 + $0xb0] sm:$0xff]
        %v2282 = vld [vmem:[%s2258 + $0xb8] sm:$0xff]
        %v2283 = vld [vmem:[%s2258 + $0xc0] sm:$0xff]
        %v2284 = vld [vmem:[%s2258 + $0xc8] sm:$0xff]
        %v2285 = vld [vmem:[%s2258 + $0xd0] sm:$0xff]
        %v2286 = vld [vmem:[%s2258 + $0xd8] sm:$0xff]
        %v2287 = vld [vmem:[%s2258 + $0xe0] sm:$0xff]
        %v2288 = vld [vmem:[%s2258 + $0xe8] sm:$0xff]
        %v2289 = vld [vmem:[%s2258 + $0xf0] sm:$0xff]
        %v2290 = vld [vmem:[%s2258 + $0xf8] sm:$0xff]
        %v2291 = vld [vmem:[%s2258 + $0x100] sm:$0xff]
        %v2292 = vld [vmem:[%s2258 + $0x108] sm:$0xff]
        %v2293 = vld [vmem:[%s2258 + $0x110] sm:$0xff]
        %v2294 = vld [vmem:[%s2258 + $0x118] sm:$0xff]
        %s2295 = scalar_lea.vmem %s1, 40
        %v2296 = vld [vmem:[%s2295] sm:$0xff]
        %v2298 = vsel %vm263, %v2259, 0
        %v2301 = vsel %vm263, %v2260, 0
        %v2304 = vsel %vm263, %v2261, 0
        %v2307 = vsel %vm263, %v2262, 0
        %v2310 = vsel %vm263, %v2263, 0
        %v2313 = vsel %vm263, %v2264, 0
        %v2316 = vsel %vm263, %v2265, 0
        %v2319 = vsel %vm263, %v2266, 0
        %v2322 = vsel %vm263, %v2267, 0
        %v2325 = vsel %vm263, %v2268, 0
        %v2328 = vsel %vm263, %v2269, 0
        %v2331 = vsel %vm263, %v2270, 0
        %v2334 = vsel %vm263, %v2271, 0
        %v2337 = vsel %vm263, %v2272, 0
        %v2340 = vsel %vm263, %v2273, 0
        %v2343 = vsel %vm263, %v2274, 0
        %v2346 = vsel %vm263, %v2275, 0
        %v2349 = vsel %vm263, %v2276, 0
        %v2352 = vsel %vm263, %v2277, 0
        %v2355 = vsel %vm263, %v2278, 0
        %v2358 = vsel %vm263, %v2279, 0
        %v2361 = vsel %vm263, %v2280, 0
        %v2364 = vsel %vm263, %v2281, 0
        %v2367 = vsel %vm263, %v2282, 0
        %v2370 = vsel %vm263, %v2283, 0
        %v2373 = vsel %vm263, %v2284, 0
        %v2376 = vsel %vm263, %v2285, 0
        %v2379 = vsel %vm263, %v2286, 0
        %v2382 = vsel %vm263, %v2287, 0
        %v2385 = vsel %vm263, %v2288, 0
        %v2388 = vsel %vm263, %v2289, 0
        %v2391 = vsel %vm263, %v2290, 0
        %v2394 = vsel %vm263, %v2291, 0
        %v2397 = vsel %vm263, %v2292, 0
        %v2400 = vsel %vm263, %v2293, 0
        %v2403 = vsel %vm263, %v2294, 0
        %2405 = vmatprep.subr.mxu0 0.0
        %2406 = vmatpush1.msra.mxu0 0.0
        %2407 = vmatprep.subr.mxu0 0.0
        %2408 = vmatpush1.msra.mxu0 0.0
        %2409 = vmatprep.subr.mxu0 0.0
        %2410 = vmatpush1.msra.mxu0 0.0
        %2411 = vmatprep.subr.mxu0 0.0
        %2412 = vmatpush1.msra.mxu0 0.0
        %2413 = vmatprep.subr.mxu0 0.0
        %2414 = vmatpush1.msra.mxu0 0.0
        %2415 = vmatprep.subr.mxu0 0.0
        %2416 = vmatpush1.msra.mxu0 0.0
        %2417 = vmatprep.subr.mxu0 0.0
        %2418 = vmatpush1.msra.mxu0 0.0
        %2419 = vmatprep.subr.mxu0 0.0
        %2420 = vmatpush1.msra.mxu0 0.0
        %2421 = vmatprep.subr.mxu0 0.0
        %2422 = vmatpush1.msra.mxu0 0.0
        %2423 = vmatprep.subr.mxu0 0.0
        %2424 = vmatpush1.msra.mxu0 0.0
        %2425 = vmatprep.subr.mxu0 0.0
        %2426 = vmatpush1.msra.mxu0 0.0
        %2427 = vmatprep.subr.mxu0 0.0
        %2428 = vmatpush1.msra.mxu0 0.0
        %2429 = vmatprep.subr.mxu0 0.0
        %2430 = vmatpush1.msra.mxu0 0.0
        %2431 = vmatprep.subr.mxu0 0.0
        %2432 = vmatpush1.msra.mxu0 0.0
        %2433 = vmatprep.subr.mxu0 0.0
        %2434 = vmatpush1.msra.mxu0 0.0
        %2435 = vmatprep.subr.mxu0 0.0
        %2436 = vmatpush1.msra.mxu0 %v2296
        %2437 = vmatprep.subr.mxu0 0.0
        %2438 = vmatpush2.msra.mxu0 0.0
        %2439 = vmatprep.subr.mxu0 0.0
        %2440 = vmatpush2.msra.mxu0 0.0
        %2441 = vmatprep.subr.mxu0 0.0
        %2442 = vmatpush2.msra.mxu0 0.0
        %2443 = vmatprep.subr.mxu0 0.0
        %2444 = vmatpush2.msra.mxu0 0.0
        %2445 = vmatprep.subr.mxu0 0.0
        %2446 = vmatpush2.msra.mxu0 0.0
        %2447 = vmatprep.subr.mxu0 0.0
        %2448 = vmatpush2.msra.mxu0 0.0
        %2449 = vmatprep.subr.mxu0 0.0
        %2450 = vmatpush2.msra.mxu0 0.0
        %2451 = vmatprep.subr.mxu0 0.0
        %2452 = vmatpush2.msra.mxu0 0.0
        %2453 = vmatprep.subr.mxu0 0.0
        %2454 = vmatpush2.msra.mxu0 0.0
        %2455 = vmatprep.subr.mxu0 0.0
        %2456 = vmatpush2.msra.mxu0 0.0
        %2457 = vmatprep.subr.mxu0 0.0
        %2458 = vmatpush2.msra.mxu0 0.0
        %2459 = vmatprep.subr.mxu0 0.0
        %2460 = vmatpush2.msra.mxu0 0.0
        %2461 = vmatprep.subr.mxu0 0.0
        %2462 = vmatpush2.msra.mxu0 0.0
        %2463 = vmatprep.subr.mxu0 0.0
        %2464 = vmatpush2.msra.mxu0 0.0
        %2465 = vmatprep.subr.mxu0 0.0
        %2466 = vmatpush2.msra.mxu0 0.0
        %2467 = vmatprep.subr.mxu0 0.0
        %2468 = vmatpush2.msra.mxu0 0.0
        %2469 = vmatprep.mubr.f32.mxu0 0.0
        %2470 = vmatmul.mubr.f32.gmra.mxu0 %v2298
        %v2471 = vpop.f32.mrf.mxu0
        %v2472 = vadd.f32 0.0, %v2471
        %v2473 = vpop.f32.mrf.mxu0
        %2474 = vmatprep.mubr.f32.mxu0 0.0
        %2475 = vmatmul.mubr.f32.gmra.mxu0 %v2301
        %v2476 = vpop.f32.mrf.mxu0
        %v2477 = vadd.f32 0.0, %v2476
        %v2478 = vpop.f32.mrf.mxu0
        %2479 = vmatprep.mubr.f32.mxu0 0.0
        %2480 = vmatmul.mubr.f32.gmra.mxu0 %v2304
        %v2481 = vpop.f32.mrf.mxu0
        %v2482 = vadd.f32 0.0, %v2481
        %v2483 = vpop.f32.mrf.mxu0
        %2484 = vmatprep.mubr.f32.mxu0 0.0
        %2485 = vmatmul.mubr.f32.gmra.mxu0 %v2307
        %v2486 = vpop.f32.mrf.mxu0
        %v2487 = vadd.f32 0.0, %v2486
        %v2488 = vpop.f32.mrf.mxu0
        %2489 = vmatprep.mubr.f32.mxu0 0.0
        %2490 = vmatmul.mubr.f32.gmra.mxu0 %v2310
        %v2491 = vpop.f32.mrf.mxu0
        %v2492 = vadd.f32 0.0, %v2491
        %v2493 = vpop.f32.mrf.mxu0
        %2494 = vmatprep.mubr.f32.mxu0 0.0
        %2495 = vmatmul.mubr.f32.gmra.mxu0 %v2313
        %v2496 = vpop.f32.mrf.mxu0
        %v2497 = vadd.f32 0.0, %v2496
        %v2498 = vpop.f32.mrf.mxu0
        %2499 = vmatprep.mubr.f32.mxu0 0.0
        %2500 = vmatmul.mubr.f32.gmra.mxu0 %v2316
        %v2501 = vpop.f32.mrf.mxu0
        %v2502 = vadd.f32 0.0, %v2501
        %v2503 = vpop.f32.mrf.mxu0
        %2504 = vmatprep.mubr.f32.mxu0 0.0
        %2505 = vmatmul.mubr.f32.gmra.mxu0 %v2319
        %v2506 = vpop.f32.mrf.mxu0
        %v2507 = vadd.f32 0.0, %v2506
        %v2508 = vpop.f32.mrf.mxu0
        %2509 = vmatprep.mubr.f32.mxu0 0.0
        %2510 = vmatmul.mubr.f32.gmra.mxu0 %v2322
        %v2511 = vpop.f32.mrf.mxu0
        %v2512 = vadd.f32 0.0, %v2511
        %v2513 = vpop.f32.mrf.mxu0
        %2514 = vmatprep.mubr.f32.mxu0 0.0
        %2515 = vmatmul.mubr.f32.gmra.mxu0 %v2325
        %v2516 = vpop.f32.mrf.mxu0
        %v2517 = vadd.f32 0.0, %v2516
        %v2518 = vpop.f32.mrf.mxu0
        %2519 = vmatprep.mubr.f32.mxu0 0.0
        %2520 = vmatmul.mubr.f32.gmra.mxu0 %v2328
        %v2521 = vpop.f32.mrf.mxu0
        %v2522 = vadd.f32 0.0, %v2521
        %v2523 = vpop.f32.mrf.mxu0
        %2524 = vmatprep.mubr.f32.mxu0 0.0
        %2525 = vmatmul.mubr.f32.gmra.mxu0 %v2331
        %v2526 = vpop.f32.mrf.mxu0
        %v2527 = vadd.f32 0.0, %v2526
        %v2528 = vpop.f32.mrf.mxu0
        %2529 = vmatprep.mubr.f32.mxu0 0.0
        %2530 = vmatmul.mubr.f32.gmra.mxu0 %v2334
        %v2531 = vpop.f32.mrf.mxu0
        %v2532 = vadd.f32 0.0, %v2531
        %v2533 = vpop.f32.mrf.mxu0
        %2534 = vmatprep.mubr.f32.mxu0 0.0
        %2535 = vmatmul.mubr.f32.gmra.mxu0 %v2337
        %v2536 = vpop.f32.mrf.mxu0
        %v2537 = vadd.f32 0.0, %v2536
        %v2538 = vpop.f32.mrf.mxu0
        %2539 = vmatprep.mubr.f32.mxu0 0.0
        %2540 = vmatmul.mubr.f32.gmra.mxu0 %v2340
        %v2541 = vpop.f32.mrf.mxu0
        %v2542 = vadd.f32 0.0, %v2541
        %v2543 = vpop.f32.mrf.mxu0
        %2544 = vmatprep.mubr.f32.mxu0 0.0
        %2545 = vmatmul.mubr.f32.gmra.mxu0 %v2343
        %v2546 = vpop.f32.mrf.mxu0
        %v2547 = vadd.f32 0.0, %v2546
        %v2548 = vpop.f32.mrf.mxu0
        %2549 = vmatprep.mubr.f32.mxu0 0.0
        %2550 = vmatmul.mubr.f32.gmra.mxu0 %v2346
        %v2551 = vpop.f32.mrf.mxu0
        %v2552 = vadd.f32 0.0, %v2551
        %v2553 = vpop.f32.mrf.mxu0
        %2554 = vmatprep.mubr.f32.mxu0 0.0
        %2555 = vmatmul.mubr.f32.gmra.mxu0 %v2349
        %v2556 = vpop.f32.mrf.mxu0
        %v2557 = vadd.f32 0.0, %v2556
        %v2558 = vpop.f32.mrf.mxu0
        %2559 = vmatprep.mubr.f32.mxu0 0.0
        %2560 = vmatmul.mubr.f32.gmra.mxu0 %v2352
        %v2561 = vpop.f32.mrf.mxu0
        %v2562 = vadd.f32 0.0, %v2561
        %v2563 = vpop.f32.mrf.mxu0
        %2564 = vmatprep.mubr.f32.mxu0 0.0
        %2565 = vmatmul.mubr.f32.gmra.mxu0 %v2355
        %v2566 = vpop.f32.mrf.mxu0
        %v2567 = vadd.f32 0.0, %v2566
        %v2568 = vpop.f32.mrf.mxu0
        %2569 = vmatprep.mubr.f32.mxu0 0.0
        %2570 = vmatmul.mubr.f32.gmra.mxu0 %v2358
        %v2571 = vpop.f32.mrf.mxu0
        %v2572 = vadd.f32 0.0, %v2571
        %v2573 = vpop.f32.mrf.mxu0
        %2574 = vmatprep.mubr.f32.mxu0 0.0
        %2575 = vmatmul.mubr.f32.gmra.mxu0 %v2361
        %v2576 = vpop.f32.mrf.mxu0
        %v2577 = vadd.f32 0.0, %v2576
        %v2578 = vpop.f32.mrf.mxu0
        %2579 = vmatprep.mubr.f32.mxu0 0.0
        %2580 = vmatmul.mubr.f32.gmra.mxu0 %v2364
        %v2581 = vpop.f32.mrf.mxu0
        %v2582 = vadd.f32 0.0, %v2581
        %v2583 = vpop.f32.mrf.mxu0
        %2584 = vmatprep.mubr.f32.mxu0 0.0
        %2585 = vmatmul.mubr.f32.gmra.mxu0 %v2367
        %v2586 = vpop.f32.mrf.mxu0
        %v2587 = vadd.f32 0.0, %v2586
        %v2588 = vpop.f32.mrf.mxu0
        %2589 = vmatprep.mubr.f32.mxu0 0.0
        %2590 = vmatmul.mubr.f32.gmra.mxu0 %v2370
        %v2591 = vpop.f32.mrf.mxu0
        %v2592 = vadd.f32 0.0, %v2591
        %v2593 = vpop.f32.mrf.mxu0
        %2594 = vmatprep.mubr.f32.mxu0 0.0
        %2595 = vmatmul.mubr.f32.gmra.mxu0 %v2373
        %v2596 = vpop.f32.mrf.mxu0
        %v2597 = vadd.f32 0.0, %v2596
        %v2598 = vpop.f32.mrf.mxu0
        %2599 = vmatprep.mubr.f32.mxu0 0.0
        %2600 = vmatmul.mubr.f32.gmra.mxu0 %v2376
        %v2601 = vpop.f32.mrf.mxu0
        %v2602 = vadd.f32 0.0, %v2601
        %v2603 = vpop.f32.mrf.mxu0
        %2604 = vmatprep.mubr.f32.mxu0 0.0
        %2605 = vmatmul.mubr.f32.gmra.mxu0 %v2379
        %v2606 = vpop.f32.mrf.mxu0
        %v2607 = vadd.f32 0.0, %v2606
        %v2608 = vpop.f32.mrf.mxu0
        %2609 = vmatprep.mubr.f32.mxu0 0.0
        %2610 = vmatmul.mubr.f32.gmra.mxu0 %v2382
        %v2611 = vpop.f32.mrf.mxu0
        %v2612 = vadd.f32 0.0, %v2611
        %v2613 = vpop.f32.mrf.mxu0
        %2614 = vmatprep.mubr.f32.mxu0 0.0
        %2615 = vmatmul.mubr.f32.gmra.mxu0 %v2385
        %v2616 = vpop.f32.mrf.mxu0
        %v2617 = vadd.f32 0.0, %v2616
        %v2618 = vpop.f32.mrf.mxu0
        %2619 = vmatprep.mubr.f32.mxu0 0.0
        %2620 = vmatmul.mubr.f32.gmra.mxu0 %v2388
        %v2621 = vpop.f32.mrf.mxu0
        %v2622 = vadd.f32 0.0, %v2621
        %v2623 = vpop.f32.mrf.mxu0
        %2624 = vmatprep.mubr.f32.mxu0 0.0
        %2625 = vmatmul.mubr.f32.gmra.mxu0 %v2391
        %v2626 = vpop.f32.mrf.mxu0
        %v2627 = vadd.f32 0.0, %v2626
        %v2628 = vpop.f32.mrf.mxu0
        %2629 = vmatprep.mubr.f32.mxu0 0.0
        %2630 = vmatmul.mubr.f32.gmra.mxu0 %v2394
        %v2631 = vpop.f32.mrf.mxu0
        %v2632 = vadd.f32 0.0, %v2631
        %v2633 = vpop.f32.mrf.mxu0
        %2634 = vmatprep.mubr.f32.mxu0 0.0
        %2635 = vmatmul.mubr.f32.gmra.mxu0 %v2397
        %v2636 = vpop.f32.mrf.mxu0
        %v2637 = vadd.f32 0.0, %v2636
        %v2638 = vpop.f32.mrf.mxu0
        %2639 = vmatprep.mubr.f32.mxu0 0.0
        %2640 = vmatmul.mubr.f32.gmra.mxu0 %v2400
        %v2641 = vpop.f32.mrf.mxu0
        %v2642 = vadd.f32 0.0, %v2641
        %v2643 = vpop.f32.mrf.mxu0
        %2644 = vmatprep.mubr.f32.mxu0 0.0
        %2645 = vmatmul.mubr.f32.gmra.mxu0 %v2403
        %v2646 = vpop.f32.mrf.mxu0
        %v2647 = vadd.f32 0.0, %v2646
        %v2648 = vpop.f32.mrf.mxu0
        %2649 = vdwg.mxu0
        %v2650 = vadd.f32 %v2221, %v2472
        %v2651 = vadd.f32 %v2222, %v2477
        %v2652 = vadd.f32 %v2223, %v2482
        %v2653 = vadd.f32 %v2224, %v2487
        %v2654 = vadd.f32 %v2225, %v2492
        %v2655 = vadd.f32 %v2226, %v2497
        %v2656 = vadd.f32 %v2227, %v2502
        %v2657 = vadd.f32 %v2228, %v2507
        %v2658 = vadd.f32 %v2229, %v2512
        %v2659 = vadd.f32 %v2230, %v2517
        %v2660 = vadd.f32 %v2231, %v2522
        %v2661 = vadd.f32 %v2232, %v2527
        %v2662 = vadd.f32 %v2233, %v2532
        %v2663 = vadd.f32 %v2234, %v2537
        %v2664 = vadd.f32 %v2235, %v2542
        %v2665 = vadd.f32 %v2236, %v2547
        %v2666 = vadd.f32 %v2237, %v2552
        %v2667 = vadd.f32 %v2238, %v2557
        %v2668 = vadd.f32 %v2239, %v2562
        %v2669 = vadd.f32 %v2240, %v2567
        %v2670 = vadd.f32 %v2241, %v2572
        %v2671 = vadd.f32 %v2242, %v2577
        %v2672 = vadd.f32 %v2243, %v2582
        %v2673 = vadd.f32 %v2244, %v2587
        %v2674 = vadd.f32 %v2245, %v2592
        %v2675 = vadd.f32 %v2246, %v2597
        %v2676 = vadd.f32 %v2247, %v2602
        %v2677 = vadd.f32 %v2248, %v2607
        %v2678 = vadd.f32 %v2249, %v2612
        %v2679 = vadd.f32 %v2250, %v2617
        %v2680 = vadd.f32 %v2251, %v2622
        %v2681 = vadd.f32 %v2252, %v2627
        %v2682 = vadd.f32 %v2253, %v2632
        %v2683 = vadd.f32 %v2254, %v2637
        %v2684 = vadd.f32 %v2255, %v2642
        %v2685 = vadd.f32 %v2256, %v2647
        %v2686 = vld [vmem:[%s2] sm:$0x1]
        %v2688 = vlaneseq
        %v2689 = vshrl.u32 %v2688, 7
        %v2690 = vsub.s32 0, %v2689
        %v2691 = vrot.slane %v2686, %v2690
        %v2693 = vadd.f32 %v2650, %v2691
        %v2694 = vadd.f32 %v2651, %v2691
        %v2695 = vadd.f32 %v2652, %v2691
        %v2696 = vadd.f32 %v2653, %v2691
        %v2697 = vadd.f32 %v2654, %v2691
        %v2698 = vadd.f32 %v2655, %v2691
        %v2699 = vadd.f32 %v2656, %v2691
        %v2700 = vadd.f32 %v2657, %v2691
        %v2701 = vadd.f32 %v2658, %v2691
        %v2702 = vadd.f32 %v2659, %v2691
        %v2703 = vadd.f32 %v2660, %v2691
        %v2704 = vadd.f32 %v2661, %v2691
        %v2705 = vadd.f32 %v2662, %v2691
        %v2706 = vadd.f32 %v2663, %v2691
        %v2707 = vadd.f32 %v2664, %v2691
        %v2708 = vadd.f32 %v2665, %v2691
        %v2709 = vadd.f32 %v2666, %v2691
        %v2710 = vadd.f32 %v2667, %v2691
        %v2711 = vadd.f32 %v2668, %v2691
        %v2712 = vadd.f32 %v2669, %v2691
        %v2713 = vadd.f32 %v2670, %v2691
        %v2714 = vadd.f32 %v2671, %v2691
        %v2715 = vadd.f32 %v2672, %v2691
        %v2716 = vadd.f32 %v2673, %v2691
        %v2717 = vadd.f32 %v2674, %v2691
        %v2718 = vadd.f32 %v2675, %v2691
        %v2719 = vadd.f32 %v2676, %v2691
        %v2720 = vadd.f32 %v2677, %v2691
        %v2721 = vadd.f32 %v2678, %v2691
        %v2722 = vadd.f32 %v2679, %v2691
        %v2723 = vadd.f32 %v2680, %v2691
        %v2724 = vadd.f32 %v2681, %v2691
        %v2725 = vadd.f32 %v2682, %v2691
        %v2726 = vadd.f32 %v2683, %v2691
        %v2727 = vadd.f32 %v2684, %v2691
        %v2728 = vadd.f32 %v2685, %v2691
        %2729 = vst [vmem:[%s177] sm:$0xff] %v2693
        %2730 = vst [vmem:[%s177 + $0x8] sm:$0xff] %v2694
        %2731 = vst [vmem:[%s177 + $0x10] sm:$0xff] %v2695
        %2732 = vst [vmem:[%s177 + $0x18] sm:$0xff] %v2696
        %2733 = vst [vmem:[%s177 + $0x20] sm:$0xff] %v2697
        %2734 = vst [vmem:[%s177 + $0x28] sm:$0xff] %v2698
        %2735 = vst [vmem:[%s177 + $0x30] sm:$0xff] %v2699
        %2736 = vst [vmem:[%s177 + $0x38] sm:$0xff] %v2700
        %2737 = vst [vmem:[%s177 + $0x40] sm:$0xff] %v2701
        %2738 = vst [vmem:[%s177 + $0x48] sm:$0xff] %v2702
        %2739 = vst [vmem:[%s177 + $0x50] sm:$0xff] %v2703
        %2740 = vst [vmem:[%s177 + $0x58] sm:$0xff] %v2704
        %2741 = vst [vmem:[%s177 + $0x60] sm:$0xff] %v2705
        %2742 = vst [vmem:[%s177 + $0x68] sm:$0xff] %v2706
        %2743 = vst [vmem:[%s177 + $0x70] sm:$0xff] %v2707
        %2744 = vst [vmem:[%s177 + $0x78] sm:$0xff] %v2708
        %2745 = vst [vmem:[%s177 + $0x80] sm:$0xff] %v2709
        %2746 = vst [vmem:[%s177 + $0x88] sm:$0xff] %v2710
        %2747 = vst [vmem:[%s177 + $0x90] sm:$0xff] %v2711
        %2748 = vst [vmem:[%s177 + $0x98] sm:$0xff] %v2712
        %2749 = vst [vmem:[%s177 + $0xa0] sm:$0xff] %v2713
        %2750 = vst [vmem:[%s177 + $0xa8] sm:$0xff] %v2714
        %2751 = vst [vmem:[%s177 + $0xb0] sm:$0xff] %v2715
        %2752 = vst [vmem:[%s177 + $0xb8] sm:$0xff] %v2716
        %2753 = vst [vmem:[%s177 + $0xc0] sm:$0xff] %v2717
        %2754 = vst [vmem:[%s177 + $0xc8] sm:$0xff] %v2718
        %2755 = vst [vmem:[%s177 + $0xd0] sm:$0xff] %v2719
        %2756 = vst [vmem:[%s177 + $0xd8] sm:$0xff] %v2720
        %2757 = vst [vmem:[%s177 + $0xe0] sm:$0xff] %v2721
        %2758 = vst [vmem:[%s177 + $0xe8] sm:$0xff] %v2722
        %2759 = vst [vmem:[%s177 + $0xf0] sm:$0xff] %v2723
        %2760 = vst [vmem:[%s177 + $0xf8] sm:$0xff] %v2724
        %2761 = vst [vmem:[%s177 + $0x100] sm:$0xff] %v2725
        %2762 = vst [vmem:[%s177 + $0x108] sm:$0xff] %v2726
        %2763 = vst [vmem:[%s177 + $0x110] sm:$0xff] %v2727
        %2764 = vst [vmem:[%s177 + $0x118] sm:$0xff] %v2728
        %s2765 = sand.u32 %s107, 1
        %s2766 = scalar_lea.sflag [#allocation3], %s2765
        %s2767 = sand.u32 %s107, 1
        %s2768 = smul.addr %s2767, 288
        %s2769 = scalar_lea.vmem [#allocation2], %s2768
        // Predicated region
        $region33: #{tpu_custom_call.1} parent=31 // pred_check
          %p2770 = pneg %p117
        $region34: #{tpu_custom_call.1} parent=31 // pred_check_branch
          %2772 = sbr.rel (%p2770) target = $region36
        $region35: #{tpu_custom_call.1} parent=31 // pred_region
          %s2773 = smul.u32 36, %s22
          %s2775 = ssub.s32 4608, 4608
          %2776 = vsyncadd %s2766, %s2775
          %s2777 = smul.addr %s21, 36
          %s2778 = sadd.s32 %s2773, %s2777
          %s2779 = smul.addr %s2778, 128
          %s2780 = scalar_lea.hbm %s3, %s2779
          %s2781 = sshll.u32 %s2769, 4
          %s2782 = int_to_ptr.vmem [resolvable:$true] %s2781
          %2787 = dma.vmem_to_hbm [thread:$0]  %s2782, 4608, %s2780, %s2766, 128, 128, 8
        $region36: #{tpu_custom_call.1} parent=31 // pred_fallthru
          _
      $region32: #{tpu_custom_call.1} parent=5 // pred_fallthru
        _
      %p2788 = scmp.le.s32.totalorder 2, %s12
      // Predicated region
      $region37: #{tpu_custom_call.1} parent=5 // pred_check
        %p2789 = pneg %p2788
      $region38: #{tpu_custom_call.1} parent=5 // pred_check_branch
        %2791 = sbr.rel (%p2789) target = $region40
      $region39: #{tpu_custom_call.1} parent=5 // pred_region
        %s2792 = ssub.s32 %s12, 2
        // Predicated region
        $region41: #{tpu_custom_call.1} parent=39 // pred_check
          %p2793 = pneg %p123
        $region42: #{tpu_custom_call.1} parent=39 // pred_check_branch
          %2795 = sbr.rel (%p2793) target = $region44
        $region43: #{tpu_custom_call.1} parent=39 // pred_region
          %s2796 = sand.u32 %s108, 1
          %s2797 = scalar_lea.sflag [#allocation3], %s2796
          %s2798 = sand.u32 %s108, 1
          %s2799 = smul.addr %s2798, 288
          %s2800 = scalar_lea.vmem [#allocation2], %s2799
          %2801 = dma.done %s2797, 4608
        $region44: #{tpu_custom_call.1} parent=39 // pred_fallthru
          _
      $region40: #{tpu_custom_call.1} parent=5 // pred_fallthru
        _
    $region6: #{tpu_custom_call.1} parent=1 // loop_footer
      %s16 = sadd.s32 1, %s12
    $region7: #{tpu_custom_call.1} parent=1 // loop_footer_branch
      %11 = sbr.rel target = $region3
    $region8: #{tpu_custom_call.1} parent=1 // loop_exit
      _
    %2802 = vsyncpa [#allocation3], 1
    %s2803 = scalar_lea.sflag [#allocation3], 1
    %2804 = vsyncpa %s2803, 1

</llo_original>
